<compile_context>
chip_gen: v6e
topology: v6e:2x2x1
jax: 0.10.0
libtpu: 0.0.40
codegen_flags: <defaults>
</compile_context>

<pallas_src>
import functools

import jax
import jax.numpy as jnp
import numpy as np
from jax import lax
from jax.experimental import pallas as pl
from jax.experimental.pallas import tpu as pltpu


def _round_up(x, m):
    return ((x + m - 1) // m) * m


def _make_projection_matrix(support, v_min, v_max, n_atom):
    """Exact C51 projection matrix: rows = source atoms, cols = target bins."""
    dz = (v_max - v_min) / (n_atom - 1)
    tz = jnp.clip(support, v_min, v_max)
    b = (tz - v_min) / dz
    l = jnp.floor(b)
    u = jnp.ceil(b)
    l_idx = l.astype(jnp.int32)
    u_idx = u.astype(jnp.int32)
    same = l_idx == u_idx                      # b exactly on a bin -> all mass to it
    w_l = jnp.where(same, 1.0, u - b)
    w_u = jnp.where(same, 0.0, b - l)
    P = (w_l[:, None] * jax.nn.one_hot(l_idx, n_atom, dtype=jnp.float32)
         + w_u[:, None] * jax.nn.one_hot(u_idx, n_atom, dtype=jnp.float32))
    return P.astype(jnp.float32)               # (L, n_atom)


def _pad_lanes(x, width):
    """Zero-pad the lane (last) axis of a 2-D array up to `width`."""
    tb, c = x.shape
    if c >= width:
        return x
    return jnp.concatenate([x, jnp.zeros((tb, width - c), x.dtype)], axis=1)


def _conv_running(p, lp, q, lq):
    """Batched full 1-D conv along lanes: running dist p (nonzero lanes [0, lp),
    zero tail) with agent PMF q (lq atoms).  Enumerates q's atoms and rolls p.

    Half-width trick: roll(p, j) is nonzero only on lanes [j, lp-1+j], so for
    each shift only the leading round_up(lp + j, 128) lanes are rolled /
    multiplied / accumulated.  Shifts are static, so the circular jnp.roll is
    an exact shift (wrapped lanes come from the all-zero tail).
    """
    lout = lp + lq - 1
    wout = _round_up(lout, 128)
    p = _pad_lanes(p, wout)
    n_chunks = wout // 128
    acc = [None] * n_chunks
    for j in range(lq):
        w = min(_round_up(lp + j, 128), wout)           # active lane width
        src = p if w == wout else p[:, :w]              # vreg-aligned slice
        shifted = src if j == 0 else jnp.roll(src, j, axis=1)
        contrib = shifted * q[:, j:j + 1]
        for c in range(w // 128):
            seg = contrib[:, c * 128:(c + 1) * 128]
            acc[c] = seg if acc[c] is None else acc[c] + seg
    return jnp.concatenate(acc, axis=1), lout            # tail lanes >= lout are 0


def _dvdn_mixer_kernel(qs_ref, proj_ref, out_ref, *,
                       n_agents, n_atom, tb_sub, n_sub, lpad):
    # qs_ref  : (n_agents, tb, n_atom)  lane-dense per-agent PMF slabs
    # proj_ref: (lpad, n_atom)          static C51 projection matrix (row-padded)
    # out_ref : (tb, n_atom)            projected mixed distribution
    def sub_chunk(r):
        # Lazy, just-in-time agent loads keep only the running distribution
        # plus one agent slab live (bounded vreg pressure).
        cur = qs_ref[0, pl.ds(r, tb_sub), :].astype(jnp.float32)
        cur_len = n_atom
        for a in range(1, n_agents):                     # sequential left-fold
            q = qs_ref[a, pl.ds(r, tb_sub), :].astype(jnp.float32)
            cur, cur_len = _conv_running(cur, cur_len, q, n_atom)
        cur = _pad_lanes(cur, lpad)                      # no-op except n_agents == 1
        # C51 projection as a single MXU matmul with the static projection matrix.
        res = jnp.dot(cur, proj_ref[...], preferred_element_type=jnp.float32)
        out_ref[pl.ds(r, tb_sub), :] = res.astype(out_ref.dtype)

    if n_sub == 1:
        sub_chunk(0)
    else:
        def body(c, carry):
            sub_chunk(pl.multiple_of(c * tb_sub, tb_sub))
            return carry
        lax.fori_loop(0, n_sub, body, 0)


def _choose_tiles(B):
    """Outer grid tile tb + inner register-resident sub-chunk tb_sub.

    tb amortizes per-grid-step overhead (64-row steps pay ~30-50% overhead);
    the grid is kept >= 2 steps whenever B allows (v7x has 2 TensorCores and a
    1-step grid also kills input/output double-buffering).  VMEM footprint is
    << 1 MiB per step on all generations, so memory is never the constraint.
    """
    tb_sub = 64
    if B >= 1024:
        tb = 256                                   # >= 4 grid steps, 4 sub-chunks
    elif B >= 256:
        tb = 128                                   # >= 2 grid steps, 2 sub-chunks
    elif B >= 128:
        tb = 64                                    # >= 2 grid steps
    else:
        tb = max(8, _round_up(max(1, (B + 1) // 2), 8))   # 2 steps when possible
        tb_sub = tb
    return tb, tb_sub, _round_up(B, tb)


def dvdn_mixer_forward(agent_qs_distri, v_min, v_max, states=None):
    """agent_qs_distri: (bs, T, n_agents, n_atom) -> (bs, T, n_atom).

    `states` is accepted for API parity but (as in the PyTorch module) unused.
    """
    del states
    bs, ep, n_agents, n_atom = agent_qs_distri.shape
    L = n_agents * n_atom - n_agents + 1
    lpad = _round_up(L, 128)

    # Static mixed support == self.q_tot_value_range1 in the PyTorch module.
    support = jnp.linspace(n_agents * v_min, n_agents * v_max, L,
                           dtype=jnp.float32)
    P = _make_projection_matrix(support, v_min, v_max, n_atom)     # (L, n_atom)
    P_pad = jnp.zeros((lpad, n_atom), jnp.float32).at[:L, :].set(P)

    B = bs * ep
    tb, tb_sub, B_pad = _choose_tiles(B)
    n_sub = tb // tb_sub

    # Lane-dense per-agent slabs: (n_agents, B_pad, n_atom).  No dtype cast
    # here — the kernel casts for free.  Padded rows are all-zero PMFs, which
    # convolve/project to zeros and are sliced off below.
    qs = jnp.transpose(agent_qs_distri.reshape(B, n_agents, n_atom), (1, 0, 2))
    if B_pad != B:
        qs = jnp.pad(qs, ((0, 0), (0, B_pad - B), (0, 0)))

    kernel = functools.partial(_dvdn_mixer_kernel, n_agents=n_agents,
                               n_atom=n_atom, tb_sub=tb_sub, n_sub=n_sub,
                               lpad=lpad)

    out = pl.pallas_call(
        kernel,
        out_shape=jax.ShapeDtypeStruct((B_pad, n_atom), jnp.float32),
        grid_spec=pltpu.PrefetchScalarGridSpec(
            num_scalar_prefetch=0,
            grid=(B_pad // tb,),
            in_specs=[
                pl.BlockSpec((n_agents, tb, n_atom), lambda i: (0, i, 0)),
                pl.BlockSpec((lpad, n_atom), lambda i: (0, 0)),
            ],
            out_specs=pl.BlockSpec((tb, n_atom), lambda i: (i, 0)),
        ),
        compiler_params=pltpu.CompilerParams(
            dimension_semantics=("parallel",)),
    )(qs, P_pad)

    return out[:B].reshape(bs, ep, n_atom)


def _reference(agent_qs_distri, v_min, v_max):
    """Pure-JAX reference (full conv per row + static C51 projection)."""
    bs, ep, n_agents, n_atom = agent_qs_distri.shape
    L = n_agents * n_atom - n_agents + 1
    support = jnp.linspace(n_agents * v_min, n_agents * v_max, L,
                           dtype=jnp.float32)
    P_ref = _make_projection_matrix(support, v_min, v_max, n_atom)
    flat = agent_qs_distri.reshape(bs * ep, n_agents, n_atom)

    def conv_row(row):
        q = row[0]
        for i in range(1, n_agents):
            q = jnp.convolve(q, row[i], mode="full")
        return q

    q_tot = jax.vmap(conv_row)(flat)                    # (B, L)
    return (q_tot @ P_ref).reshape(bs, ep, n_atom)


if __name__ == "__main__":
    v_min, v_max = -10.0, 10.0
    key = jax.random.PRNGKey(0)

    # Test 1: small config consistent with the module (n_agents=3, n_atom=51);
    # exercises the single-sub-chunk path with a 2-step grid.
    bs, ep, n_agents, n_atom = 2, 8, 3, 51
    k1, k2 = jax.random.split(key)
    logits = jax.random.normal(k1, (bs, ep, n_agents, n_atom), jnp.float32)
    agent_qs_distri = jax.nn.softmax(logits, axis=-1)   # proper per-agent PMFs

    out = dvdn_mixer_forward(agent_qs_distri, v_min, v_max)
    out = jax.block_until_ready(out)
    ref = _reference(agent_qs_distri, v_min, v_max)
    np.testing.assert_allclose(np.asarray(out), np.asarray(ref),
                               rtol=1e-4, atol=1e-5)
    assert out.shape == (bs, ep, n_atom)

    # Test 2: larger batch — exercises the inner fori_loop sub-chunk path
    # (tb=128, tb_sub=64, grid of 4).
    bs2, ep2 = 4, 128
    logits2 = jax.random.normal(k2, (bs2, ep2, n_agents, n_atom), jnp.float32)
    qs2 = jax.nn.softmax(logits2, axis=-1)
    out2 = jax.block_until_ready(dvdn_mixer_forward(qs2, v_min, v_max))
    ref2 = _reference(qs2, v_min, v_max)
    np.testing.assert_allclose(np.asarray(out2), np.asarray(ref2),
                               rtol=1e-4, atol=1e-5)
    assert out2.shape == (bs2, ep2, n_atom)

    print("KERNEL_OK")
</pallas_src>

<mosaic_0001>
module attributes {stable_mosaic.version = 11 : i64} {
  func.func @_dvdn_mixer_kernel(%arg0: i32, %arg1: memref<3x8x51xf32, #tpu.memory_space<vmem>>, %arg2: memref<256x51xf32, #tpu.memory_space<vmem>>, %arg3: memref<8x51xf32, #tpu.memory_space<vmem>>) attributes {dimension_semantics = [#tpu.dimension_semantics<parallel>], iteration_bounds = array<i64: 2>, scalar_prefetch = 0 : i64, scratch_operands = 0 : i64, tpu.core_type = #tpu.core_type<tc>, window_params = [{transform_indices = @transform_0, window_bounds = array<i64: 3, 8, 51>}, {pipeline_mode = #tpu.pipeline_mode<synchronous>, transform_indices = @transform_1, window_bounds = array<i64: 256, 51>}, {transform_indices = @transform_2, window_bounds = array<i64: 8, 51>}]} {
    %c0 = arith.constant 0 : index
    %c0_0 = arith.constant 0 : index
    %c0_1 = arith.constant 0 : index
    %0 = vector.load %arg1[%c0, %c0_0, %c0_1] : memref<3x8x51xf32, #tpu.memory_space<vmem>>, vector<1x8x51xf32>
    %1 = vector.shape_cast %0 : vector<1x8x51xf32> to vector<8x51xf32>
    %c1 = arith.constant 1 : index
    %c0_2 = arith.constant 0 : index
    %c0_3 = arith.constant 0 : index
    %2 = vector.load %arg1[%c1, %c0_2, %c0_3] : memref<3x8x51xf32, #tpu.memory_space<vmem>>, vector<1x8x51xf32>
    %3 = vector.shape_cast %2 : vector<1x8x51xf32> to vector<8x51xf32>
    %cst = arith.constant 0.000000e+00 : f32
    %4 = vector.broadcast %cst : f32 to vector<8x77xf32>
    %5 = tpu.concatenate %1, %4 in 1 : vector<8x51xf32>, vector<8x77xf32> -> vector<8x128xf32>
    %6 = vector.extract_strided_slice %3 {offsets = [0, 0], sizes = [8, 1], strides = [1, 1]} : vector<8x51xf32> to vector<8x1xf32>
    %7 = vector.broadcast %6 : vector<8x1xf32> to vector<8x128xf32>
    %8 = arith.mulf %5, %7 : vector<8x128xf32>
    %9 = vector.extract_strided_slice %5 {offsets = [0, 127], sizes = [8, 1], strides = [1, 1]} : vector<8x128xf32> to vector<8x1xf32>
    %10 = vector.extract_strided_slice %5 {offsets = [0, 0], sizes = [8, 127], strides = [1, 1]} : vector<8x128xf32> to vector<8x127xf32>
    %11 = tpu.concatenate %9, %10 in 1 : vector<8x1xf32>, vector<8x127xf32> -> vector<8x128xf32>
    %12 = vector.extract_strided_slice %3 {offsets = [0, 1], sizes = [8, 1], strides = [1, 1]} : vector<8x51xf32> to vector<8x1xf32>
    %13 = vector.broadcast %12 : vector<8x1xf32> to vector<8x128xf32>
    %14 = arith.mulf %11, %13 : vector<8x128xf32>
    %15 = arith.addf %8, %14 : vector<8x128xf32>
    %16 = vector.extract_strided_slice %5 {offsets = [0, 126], sizes = [8, 2], strides = [1, 1]} : vector<8x128xf32> to vector<8x2xf32>
    %17 = vector.extract_strided_slice %5 {offsets = [0, 0], sizes = [8, 126], strides = [1, 1]} : vector<8x128xf32> to vector<8x126xf32>
    %18 = tpu.concatenate %16, %17 in 1 : vector<8x2xf32>, vector<8x126xf32> -> vector<8x128xf32>
    %19 = vector.extract_strided_slice %3 {offsets = [0, 2], sizes = [8, 1], strides = [1, 1]} : vector<8x51xf32> to vector<8x1xf32>
    %20 = vector.broadcast %19 : vector<8x1xf32> to vector<8x128xf32>
    %21 = arith.mulf %18, %20 : vector<8x128xf32>
    %22 = arith.addf %15, %21 : vector<8x128xf32>
    %23 = vector.extract_strided_slice %5 {offsets = [0, 125], sizes = [8, 3], strides = [1, 1]} : vector<8x128xf32> to vector<8x3xf32>
    %24 = vector.extract_strided_slice %5 {offsets = [0, 0], sizes = [8, 125], strides = [1, 1]} : vector<8x128xf32> to vector<8x125xf32>
    %25 = tpu.concatenate %23, %24 in 1 : vector<8x3xf32>, vector<8x125xf32> -> vector<8x128xf32>
    %26 = vector.extract_strided_slice %3 {offsets = [0, 3], sizes = [8, 1], strides = [1, 1]} : vector<8x51xf32> to vector<8x1xf32>
    %27 = vector.broadcast %26 : vector<8x1xf32> to vector<8x128xf32>
    %28 = arith.mulf %25, %27 : vector<8x128xf32>
    %29 = arith.addf %22, %28 : vector<8x128xf32>
    %30 = vector.extract_strided_slice %5 {offsets = [0, 124], sizes = [8, 4], strides = [1, 1]} : vector<8x128xf32> to vector<8x4xf32>
    %31 = vector.extract_strided_slice %5 {offsets = [0, 0], sizes = [8, 124], strides = [1, 1]} : vector<8x128xf32> to vector<8x124xf32>
    %32 = tpu.concatenate %30, %31 in 1 : vector<8x4xf32>, vector<8x124xf32> -> vector<8x128xf32>
    %33 = vector.extract_strided_slice %3 {offsets = [0, 4], sizes = [8, 1], strides = [1, 1]} : vector<8x51xf32> to vector<8x1xf32>
    %34 = vector.broadcast %33 : vector<8x1xf32> to vector<8x128xf32>
    %35 = arith.mulf %32, %34 : vector<8x128xf32>
    %36 = arith.addf %29, %35 : vector<8x128xf32>
    %37 = vector.extract_strided_slice %5 {offsets = [0, 123], sizes = [8, 5], strides = [1, 1]} : vector<8x128xf32> to vector<8x5xf32>
    %38 = vector.extract_strided_slice %5 {offsets = [0, 0], sizes = [8, 123], strides = [1, 1]} : vector<8x128xf32> to vector<8x123xf32>
    %39 = tpu.concatenate %37, %38 in 1 : vector<8x5xf32>, vector<8x123xf32> -> vector<8x128xf32>
    %40 = vector.extract_strided_slice %3 {offsets = [0, 5], sizes = [8, 1], strides = [1, 1]} : vector<8x51xf32> to vector<8x1xf32>
    %41 = vector.broadcast %40 : vector<8x1xf32> to vector<8x128xf32>
    %42 = arith.mulf %39, %41 : vector<8x128xf32>
    %43 = arith.addf %36, %42 : vector<8x128xf32>
    %44 = vector.extract_strided_slice %5 {offsets = [0, 122], sizes = [8, 6], strides = [1, 1]} : vector<8x128xf32> to vector<8x6xf32>
    %45 = vector.extract_strided_slice %5 {offsets = [0, 0], sizes = [8, 122], strides = [1, 1]} : vector<8x128xf32> to vector<8x122xf32>
    %46 = tpu.concatenate %44, %45 in 1 : vector<8x6xf32>, vector<8x122xf32> -> vector<8x128xf32>
    %47 = vector.extract_strided_slice %3 {offsets = [0, 6], sizes = [8, 1], strides = [1, 1]} : vector<8x51xf32> to vector<8x1xf32>
    %48 = vector.broadcast %47 : vector<8x1xf32> to vector<8x128xf32>
    %49 = arith.mulf %46, %48 : vector<8x128xf32>
    %50 = arith.addf %43, %49 : vector<8x128xf32>
    %51 = vector.extract_strided_slice %5 {offsets = [0, 121], sizes = [8, 7], strides = [1, 1]} : vector<8x128xf32> to vector<8x7xf32>
    %52 = vector.extract_strided_slice %5 {offsets = [0, 0], sizes = [8, 121], strides = [1, 1]} : vector<8x128xf32> to vector<8x121xf32>
    %53 = tpu.concatenate %51, %52 in 1 : vector<8x7xf32>, vector<8x121xf32> -> vector<8x128xf32>
    %54 = vector.extract_strided_slice %3 {offsets = [0, 7], sizes = [8, 1], strides = [1, 1]} : vector<8x51xf32> to vector<8x1xf32>
    %55 = vector.broadcast %54 : vector<8x1xf32> to vector<8x128xf32>
    %56 = arith.mulf %53, %55 : vector<8x128xf32>
    %57 = arith.addf %50, %56 : vector<8x128xf32>
    %58 = vector.extract_strided_slice %5 {offsets = [0, 120], sizes = [8, 8], strides = [1, 1]} : vector<8x128xf32> to vector<8x8xf32>
    %59 = vector.extract_strided_slice %5 {offsets = [0, 0], sizes = [8, 120], strides = [1, 1]} : vector<8x128xf32> to vector<8x120xf32>
    %60 = tpu.concatenate %58, %59 in 1 : vector<8x8xf32>, vector<8x120xf32> -> vector<8x128xf32>
    %61 = vector.extract_strided_slice %3 {offsets = [0, 8], sizes = [8, 1], strides = [1, 1]} : vector<8x51xf32> to vector<8x1xf32>
    %62 = vector.broadcast %61 : vector<8x1xf32> to vector<8x128xf32>
    %63 = arith.mulf %60, %62 : vector<8x128xf32>
    %64 = arith.addf %57, %63 : vector<8x128xf32>
    %65 = vector.extract_strided_slice %5 {offsets = [0, 119], sizes = [8, 9], strides = [1, 1]} : vector<8x128xf32> to vector<8x9xf32>
    %66 = vector.extract_strided_slice %5 {offsets = [0, 0], sizes = [8, 119], strides = [1, 1]} : vector<8x128xf32> to vector<8x119xf32>
    %67 = tpu.concatenate %65, %66 in 1 : vector<8x9xf32>, vector<8x119xf32> -> vector<8x128xf32>
    %68 = vector.extract_strided_slice %3 {offsets = [0, 9], sizes = [8, 1], strides = [1, 1]} : vector<8x51xf32> to vector<8x1xf32>
    %69 = vector.broadcast %68 : vector<8x1xf32> to vector<8x128xf32>
    %70 = arith.mulf %67, %69 : vector<8x128xf32>
    %71 = arith.addf %64, %70 : vector<8x128xf32>
    %72 = vector.extract_strided_slice %5 {offsets = [0, 118], sizes = [8, 10], strides = [1, 1]} : vector<8x128xf32> to vector<8x10xf32>
    %73 = vector.extract_strided_slice %5 {offsets = [0, 0], sizes = [8, 118], strides = [1, 1]} : vector<8x128xf32> to vector<8x118xf32>
    %74 = tpu.concatenate %72, %73 in 1 : vector<8x10xf32>, vector<8x118xf32> -> vector<8x128xf32>
    %75 = vector.extract_strided_slice %3 {offsets = [0, 10], sizes = [8, 1], strides = [1, 1]} : vector<8x51xf32> to vector<8x1xf32>
    %76 = vector.broadcast %75 : vector<8x1xf32> to vector<8x128xf32>
    %77 = arith.mulf %74, %76 : vector<8x128xf32>
    %78 = arith.addf %71, %77 : vector<8x128xf32>
    %79 = vector.extract_strided_slice %5 {offsets = [0, 117], sizes = [8, 11], strides = [1, 1]} : vector<8x128xf32> to vector<8x11xf32>
    %80 = vector.extract_strided_slice %5 {offsets = [0, 0], sizes = [8, 117], strides = [1, 1]} : vector<8x128xf32> to vector<8x117xf32>
    %81 = tpu.concatenate %79, %80 in 1 : vector<8x11xf32>, vector<8x117xf32> -> vector<8x128xf32>
    %82 = vector.extract_strided_slice %3 {offsets = [0, 11], sizes = [8, 1], strides = [1, 1]} : vector<8x51xf32> to vector<8x1xf32>
    %83 = vector.broadcast %82 : vector<8x1xf32> to vector<8x128xf32>
    %84 = arith.mulf %81, %83 : vector<8x128xf32>
    %85 = arith.addf %78, %84 : vector<8x128xf32>
    %86 = vector.extract_strided_slice %5 {offsets = [0, 116], sizes = [8, 12], strides = [1, 1]} : vector<8x128xf32> to vector<8x12xf32>
    %87 = vector.extract_strided_slice %5 {offsets = [0, 0], sizes = [8, 116], strides = [1, 1]} : vector<8x128xf32> to vector<8x116xf32>
    %88 = tpu.concatenate %86, %87 in 1 : vector<8x12xf32>, vector<8x116xf32> -> vector<8x128xf32>
    %89 = vector.extract_strided_slice %3 {offsets = [0, 12], sizes = [8, 1], strides = [1, 1]} : vector<8x51xf32> to vector<8x1xf32>
    %90 = vector.broadcast %89 : vector<8x1xf32> to vector<8x128xf32>
    %91 = arith.mulf %88, %90 : vector<8x128xf32>
    %92 = arith.addf %85, %91 : vector<8x128xf32>
    %93 = vector.extract_strided_slice %5 {offsets = [0, 115], sizes = [8, 13], strides = [1, 1]} : vector<8x128xf32> to vector<8x13xf32>
    %94 = vector.extract_strided_slice %5 {offsets = [0, 0], sizes = [8, 115], strides = [1, 1]} : vector<8x128xf32> to vector<8x115xf32>
    %95 = tpu.concatenate %93, %94 in 1 : vector<8x13xf32>, vector<8x115xf32> -> vector<8x128xf32>
    %96 = vector.extract_strided_slice %3 {offsets = [0, 13], sizes = [8, 1], strides = [1, 1]} : vector<8x51xf32> to vector<8x1xf32>
    %97 = vector.broadcast %96 : vector<8x1xf32> to vector<8x128xf32>
    %98 = arith.mulf %95, %97 : vector<8x128xf32>
    %99 = arith.addf %92, %98 : vector<8x128xf32>
    %100 = vector.extract_strided_slice %5 {offsets = [0, 114], sizes = [8, 14], strides = [1, 1]} : vector<8x128xf32> to vector<8x14xf32>
    %101 = vector.extract_strided_slice %5 {offsets = [0, 0], sizes = [8, 114], strides = [1, 1]} : vector<8x128xf32> to vector<8x114xf32>
    %102 = tpu.concatenate %100, %101 in 1 : vector<8x14xf32>, vector<8x114xf32> -> vector<8x128xf32>
    %103 = vector.extract_strided_slice %3 {offsets = [0, 14], sizes = [8, 1], strides = [1, 1]} : vector<8x51xf32> to vector<8x1xf32>
    %104 = vector.broadcast %103 : vector<8x1xf32> to vector<8x128xf32>
    %105 = arith.mulf %102, %104 : vector<8x128xf32>
    %106 = arith.addf %99, %105 : vector<8x128xf32>
    %107 = vector.extract_strided_slice %5 {offsets = [0, 113], sizes = [8, 15], strides = [1, 1]} : vector<8x128xf32> to vector<8x15xf32>
    %108 = vector.extract_strided_slice %5 {offsets = [0, 0], sizes = [8, 113], strides = [1, 1]} : vector<8x128xf32> to vector<8x113xf32>
    %109 = tpu.concatenate %107, %108 in 1 : vector<8x15xf32>, vector<8x113xf32> -> vector<8x128xf32>
    %110 = vector.extract_strided_slice %3 {offsets = [0, 15], sizes = [8, 1], strides = [1, 1]} : vector<8x51xf32> to vector<8x1xf32>
    %111 = vector.broadcast %110 : vector<8x1xf32> to vector<8x128xf32>
    %112 = arith.mulf %109, %111 : vector<8x128xf32>
    %113 = arith.addf %106, %112 : vector<8x128xf32>
    %114 = vector.extract_strided_slice %5 {offsets = [0, 112], sizes = [8, 16], strides = [1, 1]} : vector<8x128xf32> to vector<8x16xf32>
    %115 = vector.extract_strided_slice %5 {offsets = [0, 0], sizes = [8, 112], strides = [1, 1]} : vector<8x128xf32> to vector<8x112xf32>
    %116 = tpu.concatenate %114, %115 in 1 : vector<8x16xf32>, vector<8x112xf32> -> vector<8x128xf32>
    %117 = vector.extract_strided_slice %3 {offsets = [0, 16], sizes = [8, 1], strides = [1, 1]} : vector<8x51xf32> to vector<8x1xf32>
    %118 = vector.broadcast %117 : vector<8x1xf32> to vector<8x128xf32>
    %119 = arith.mulf %116, %118 : vector<8x128xf32>
    %120 = arith.addf %113, %119 : vector<8x128xf32>
    %121 = vector.extract_strided_slice %5 {offsets = [0, 111], sizes = [8, 17], strides = [1, 1]} : vector<8x128xf32> to vector<8x17xf32>
    %122 = vector.extract_strided_slice %5 {offsets = [0, 0], sizes = [8, 111], strides = [1, 1]} : vector<8x128xf32> to vector<8x111xf32>
    %123 = tpu.concatenate %121, %122 in 1 : vector<8x17xf32>, vector<8x111xf32> -> vector<8x128xf32>
    %124 = vector.extract_strided_slice %3 {offsets = [0, 17], sizes = [8, 1], strides = [1, 1]} : vector<8x51xf32> to vector<8x1xf32>
    %125 = vector.broadcast %124 : vector<8x1xf32> to vector<8x128xf32>
    %126 = arith.mulf %123, %125 : vector<8x128xf32>
    %127 = arith.addf %120, %126 : vector<8x128xf32>
    %128 = vector.extract_strided_slice %5 {offsets = [0, 110], sizes = [8, 18], strides = [1, 1]} : vector<8x128xf32> to vector<8x18xf32>
    %129 = vector.extract_strided_slice %5 {offsets = [0, 0], sizes = [8, 110], strides = [1, 1]} : vector<8x128xf32> to vector<8x110xf32>
    %130 = tpu.concatenate %128, %129 in 1 : vector<8x18xf32>, vector<8x110xf32> -> vector<8x128xf32>
    %131 = vector.extract_strided_slice %3 {offsets = [0, 18], sizes = [8, 1], strides = [1, 1]} : vector<8x51xf32> to vector<8x1xf32>
    %132 = vector.broadcast %131 : vector<8x1xf32> to vector<8x128xf32>
    %133 = arith.mulf %130, %132 : vector<8x128xf32>
    %134 = arith.addf %127, %133 : vector<8x128xf32>
    %135 = vector.extract_strided_slice %5 {offsets = [0, 109], sizes = [8, 19], strides = [1, 1]} : vector<8x128xf32> to vector<8x19xf32>
    %136 = vector.extract_strided_slice %5 {offsets = [0, 0], sizes = [8, 109], strides = [1, 1]} : vector<8x128xf32> to vector<8x109xf32>
    %137 = tpu.concatenate %135, %136 in 1 : vector<8x19xf32>, vector<8x109xf32> -> vector<8x128xf32>
    %138 = vector.extract_strided_slice %3 {offsets = [0, 19], sizes = [8, 1], strides = [1, 1]} : vector<8x51xf32> to vector<8x1xf32>
    %139 = vector.broadcast %138 : vector<8x1xf32> to vector<8x128xf32>
    %140 = arith.mulf %137, %139 : vector<8x128xf32>
    %141 = arith.addf %134, %140 : vector<8x128xf32>
    %142 = vector.extract_strided_slice %5 {offsets = [0, 108], sizes = [8, 20], strides = [1, 1]} : vector<8x128xf32> to vector<8x20xf32>
    %143 = vector.extract_strided_slice %5 {offsets = [0, 0], sizes = [8, 108], strides = [1, 1]} : vector<8x128xf32> to vector<8x108xf32>
    %144 = tpu.concatenate %142, %143 in 1 : vector<8x20xf32>, vector<8x108xf32> -> vector<8x128xf32>
    %145 = vector.extract_strided_slice %3 {offsets = [0, 20], sizes = [8, 1], strides = [1, 1]} : vector<8x51xf32> to vector<8x1xf32>
    %146 = vector.broadcast %145 : vector<8x1xf32> to vector<8x128xf32>
    %147 = arith.mulf %144, %146 : vector<8x128xf32>
    %148 = arith.addf %141, %147 : vector<8x128xf32>
    %149 = vector.extract_strided_slice %5 {offsets = [0, 107], sizes = [8, 21], strides = [1, 1]} : vector<8x128xf32> to vector<8x21xf32>
    %150 = vector.extract_strided_slice %5 {offsets = [0, 0], sizes = [8, 107], strides = [1, 1]} : vector<8x128xf32> to vector<8x107xf32>
    %151 = tpu.concatenate %149, %150 in 1 : vector<8x21xf32>, vector<8x107xf32> -> vector<8x128xf32>
    %152 = vector.extract_strided_slice %3 {offsets = [0, 21], sizes = [8, 1], strides = [1, 1]} : vector<8x51xf32> to vector<8x1xf32>
    %153 = vector.broadcast %152 : vector<8x1xf32> to vector<8x128xf32>
    %154 = arith.mulf %151, %153 : vector<8x128xf32>
    %155 = arith.addf %148, %154 : vector<8x128xf32>
    %156 = vector.extract_strided_slice %5 {offsets = [0, 106], sizes = [8, 22], strides = [1, 1]} : vector<8x128xf32> to vector<8x22xf32>
    %157 = vector.extract_strided_slice %5 {offsets = [0, 0], sizes = [8, 106], strides = [1, 1]} : vector<8x128xf32> to vector<8x106xf32>
    %158 = tpu.concatenate %156, %157 in 1 : vector<8x22xf32>, vector<8x106xf32> -> vector<8x128xf32>
    %159 = vector.extract_strided_slice %3 {offsets = [0, 22], sizes = [8, 1], strides = [1, 1]} : vector<8x51xf32> to vector<8x1xf32>
    %160 = vector.broadcast %159 : vector<8x1xf32> to vector<8x128xf32>
    %161 = arith.mulf %158, %160 : vector<8x128xf32>
    %162 = arith.addf %155, %161 : vector<8x128xf32>
    %163 = vector.extract_strided_slice %5 {offsets = [0, 105], sizes = [8, 23], strides = [1, 1]} : vector<8x128xf32> to vector<8x23xf32>
    %164 = vector.extract_strided_slice %5 {offsets = [0, 0], sizes = [8, 105], strides = [1, 1]} : vector<8x128xf32> to vector<8x105xf32>
    %165 = tpu.concatenate %163, %164 in 1 : vector<8x23xf32>, vector<8x105xf32> -> vector<8x128xf32>
    %166 = vector.extract_strided_slice %3 {offsets = [0, 23], sizes = [8, 1], strides = [1, 1]} : vector<8x51xf32> to vector<8x1xf32>
    %167 = vector.broadcast %166 : vector<8x1xf32> to vector<8x128xf32>
    %168 = arith.mulf %165, %167 : vector<8x128xf32>
    %169 = arith.addf %162, %168 : vector<8x128xf32>
    %170 = vector.extract_strided_slice %5 {offsets = [0, 104], sizes = [8, 24], strides = [1, 1]} : vector<8x128xf32> to vector<8x24xf32>
    %171 = vector.extract_strided_slice %5 {offsets = [0, 0], sizes = [8, 104], strides = [1, 1]} : vector<8x128xf32> to vector<8x104xf32>
    %172 = tpu.concatenate %170, %171 in 1 : vector<8x24xf32>, vector<8x104xf32> -> vector<8x128xf32>
    %173 = vector.extract_strided_slice %3 {offsets = [0, 24], sizes = [8, 1], strides = [1, 1]} : vector<8x51xf32> to vector<8x1xf32>
    %174 = vector.broadcast %173 : vector<8x1xf32> to vector<8x128xf32>
    %175 = arith.mulf %172, %174 : vector<8x128xf32>
    %176 = arith.addf %169, %175 : vector<8x128xf32>
    %177 = vector.extract_strided_slice %5 {offsets = [0, 103], sizes = [8, 25], strides = [1, 1]} : vector<8x128xf32> to vector<8x25xf32>
    %178 = vector.extract_strided_slice %5 {offsets = [0, 0], sizes = [8, 103], strides = [1, 1]} : vector<8x128xf32> to vector<8x103xf32>
    %179 = tpu.concatenate %177, %178 in 1 : vector<8x25xf32>, vector<8x103xf32> -> vector<8x128xf32>
    %180 = vector.extract_strided_slice %3 {offsets = [0, 25], sizes = [8, 1], strides = [1, 1]} : vector<8x51xf32> to vector<8x1xf32>
    %181 = vector.broadcast %180 : vector<8x1xf32> to vector<8x128xf32>
    %182 = arith.mulf %179, %181 : vector<8x128xf32>
    %183 = arith.addf %176, %182 : vector<8x128xf32>
    %184 = vector.extract_strided_slice %5 {offsets = [0, 102], sizes = [8, 26], strides = [1, 1]} : vector<8x128xf32> to vector<8x26xf32>
    %185 = vector.extract_strided_slice %5 {offsets = [0, 0], sizes = [8, 102], strides = [1, 1]} : vector<8x128xf32> to vector<8x102xf32>
    %186 = tpu.concatenate %184, %185 in 1 : vector<8x26xf32>, vector<8x102xf32> -> vector<8x128xf32>
    %187 = vector.extract_strided_slice %3 {offsets = [0, 26], sizes = [8, 1], strides = [1, 1]} : vector<8x51xf32> to vector<8x1xf32>
    %188 = vector.broadcast %187 : vector<8x1xf32> to vector<8x128xf32>
    %189 = arith.mulf %186, %188 : vector<8x128xf32>
    %190 = arith.addf %183, %189 : vector<8x128xf32>
    %191 = vector.extract_strided_slice %5 {offsets = [0, 101], sizes = [8, 27], strides = [1, 1]} : vector<8x128xf32> to vector<8x27xf32>
    %192 = vector.extract_strided_slice %5 {offsets = [0, 0], sizes = [8, 101], strides = [1, 1]} : vector<8x128xf32> to vector<8x101xf32>
    %193 = tpu.concatenate %191, %192 in 1 : vector<8x27xf32>, vector<8x101xf32> -> vector<8x128xf32>
    %194 = vector.extract_strided_slice %3 {offsets = [0, 27], sizes = [8, 1], strides = [1, 1]} : vector<8x51xf32> to vector<8x1xf32>
    %195 = vector.broadcast %194 : vector<8x1xf32> to vector<8x128xf32>
    %196 = arith.mulf %193, %195 : vector<8x128xf32>
    %197 = arith.addf %190, %196 : vector<8x128xf32>
    %198 = vector.extract_strided_slice %5 {offsets = [0, 100], sizes = [8, 28], strides = [1, 1]} : vector<8x128xf32> to vector<8x28xf32>
    %199 = vector.extract_strided_slice %5 {offsets = [0, 0], sizes = [8, 100], strides = [1, 1]} : vector<8x128xf32> to vector<8x100xf32>
    %200 = tpu.concatenate %198, %199 in 1 : vector<8x28xf32>, vector<8x100xf32> -> vector<8x128xf32>
    %201 = vector.extract_strided_slice %3 {offsets = [0, 28], sizes = [8, 1], strides = [1, 1]} : vector<8x51xf32> to vector<8x1xf32>
    %202 = vector.broadcast %201 : vector<8x1xf32> to vector<8x128xf32>
    %203 = arith.mulf %200, %202 : vector<8x128xf32>
    %204 = arith.addf %197, %203 : vector<8x128xf32>
    %205 = vector.extract_strided_slice %5 {offsets = [0, 99], sizes = [8, 29], strides = [1, 1]} : vector<8x128xf32> to vector<8x29xf32>
    %206 = vector.extract_strided_slice %5 {offsets = [0, 0], sizes = [8, 99], strides = [1, 1]} : vector<8x128xf32> to vector<8x99xf32>
    %207 = tpu.concatenate %205, %206 in 1 : vector<8x29xf32>, vector<8x99xf32> -> vector<8x128xf32>
    %208 = vector.extract_strided_slice %3 {offsets = [0, 29], sizes = [8, 1], strides = [1, 1]} : vector<8x51xf32> to vector<8x1xf32>
    %209 = vector.broadcast %208 : vector<8x1xf32> to vector<8x128xf32>
    %210 = arith.mulf %207, %209 : vector<8x128xf32>
    %211 = arith.addf %204, %210 : vector<8x128xf32>
    %212 = vector.extract_strided_slice %5 {offsets = [0, 98], sizes = [8, 30], strides = [1, 1]} : vector<8x128xf32> to vector<8x30xf32>
    %213 = vector.extract_strided_slice %5 {offsets = [0, 0], sizes = [8, 98], strides = [1, 1]} : vector<8x128xf32> to vector<8x98xf32>
    %214 = tpu.concatenate %212, %213 in 1 : vector<8x30xf32>, vector<8x98xf32> -> vector<8x128xf32>
    %215 = vector.extract_strided_slice %3 {offsets = [0, 30], sizes = [8, 1], strides = [1, 1]} : vector<8x51xf32> to vector<8x1xf32>
    %216 = vector.broadcast %215 : vector<8x1xf32> to vector<8x128xf32>
    %217 = arith.mulf %214, %216 : vector<8x128xf32>
    %218 = arith.addf %211, %217 : vector<8x128xf32>
    %219 = vector.extract_strided_slice %5 {offsets = [0, 97], sizes = [8, 31], strides = [1, 1]} : vector<8x128xf32> to vector<8x31xf32>
    %220 = vector.extract_strided_slice %5 {offsets = [0, 0], sizes = [8, 97], strides = [1, 1]} : vector<8x128xf32> to vector<8x97xf32>
    %221 = tpu.concatenate %219, %220 in 1 : vector<8x31xf32>, vector<8x97xf32> -> vector<8x128xf32>
    %222 = vector.extract_strided_slice %3 {offsets = [0, 31], sizes = [8, 1], strides = [1, 1]} : vector<8x51xf32> to vector<8x1xf32>
    %223 = vector.broadcast %222 : vector<8x1xf32> to vector<8x128xf32>
    %224 = arith.mulf %221, %223 : vector<8x128xf32>
    %225 = arith.addf %218, %224 : vector<8x128xf32>
    %226 = vector.extract_strided_slice %5 {offsets = [0, 96], sizes = [8, 32], strides = [1, 1]} : vector<8x128xf32> to vector<8x32xf32>
    %227 = vector.extract_strided_slice %5 {offsets = [0, 0], sizes = [8, 96], strides = [1, 1]} : vector<8x128xf32> to vector<8x96xf32>
    %228 = tpu.concatenate %226, %227 in 1 : vector<8x32xf32>, vector<8x96xf32> -> vector<8x128xf32>
    %229 = vector.extract_strided_slice %3 {offsets = [0, 32], sizes = [8, 1], strides = [1, 1]} : vector<8x51xf32> to vector<8x1xf32>
    %230 = vector.broadcast %229 : vector<8x1xf32> to vector<8x128xf32>
    %231 = arith.mulf %228, %230 : vector<8x128xf32>
    %232 = arith.addf %225, %231 : vector<8x128xf32>
    %233 = vector.extract_strided_slice %5 {offsets = [0, 95], sizes = [8, 33], strides = [1, 1]} : vector<8x128xf32> to vector<8x33xf32>
    %234 = vector.extract_strided_slice %5 {offsets = [0, 0], sizes = [8, 95], strides = [1, 1]} : vector<8x128xf32> to vector<8x95xf32>
    %235 = tpu.concatenate %233, %234 in 1 : vector<8x33xf32>, vector<8x95xf32> -> vector<8x128xf32>
    %236 = vector.extract_strided_slice %3 {offsets = [0, 33], sizes = [8, 1], strides = [1, 1]} : vector<8x51xf32> to vector<8x1xf32>
    %237 = vector.broadcast %236 : vector<8x1xf32> to vector<8x128xf32>
    %238 = arith.mulf %235, %237 : vector<8x128xf32>
    %239 = arith.addf %232, %238 : vector<8x128xf32>
    %240 = vector.extract_strided_slice %5 {offsets = [0, 94], sizes = [8, 34], strides = [1, 1]} : vector<8x128xf32> to vector<8x34xf32>
    %241 = vector.extract_strided_slice %5 {offsets = [0, 0], sizes = [8, 94], strides = [1, 1]} : vector<8x128xf32> to vector<8x94xf32>
    %242 = tpu.concatenate %240, %241 in 1 : vector<8x34xf32>, vector<8x94xf32> -> vector<8x128xf32>
    %243 = vector.extract_strided_slice %3 {offsets = [0, 34], sizes = [8, 1], strides = [1, 1]} : vector<8x51xf32> to vector<8x1xf32>
    %244 = vector.broadcast %243 : vector<8x1xf32> to vector<8x128xf32>
    %245 = arith.mulf %242, %244 : vector<8x128xf32>
    %246 = arith.addf %239, %245 : vector<8x128xf32>
    %247 = vector.extract_strided_slice %5 {offsets = [0, 93], sizes = [8, 35], strides = [1, 1]} : vector<8x128xf32> to vector<8x35xf32>
    %248 = vector.extract_strided_slice %5 {offsets = [0, 0], sizes = [8, 93], strides = [1, 1]} : vector<8x128xf32> to vector<8x93xf32>
    %249 = tpu.concatenate %247, %248 in 1 : vector<8x35xf32>, vector<8x93xf32> -> vector<8x128xf32>
    %250 = vector.extract_strided_slice %3 {offsets = [0, 35], sizes = [8, 1], strides = [1, 1]} : vector<8x51xf32> to vector<8x1xf32>
    %251 = vector.broadcast %250 : vector<8x1xf32> to vector<8x128xf32>
    %252 = arith.mulf %249, %251 : vector<8x128xf32>
    %253 = arith.addf %246, %252 : vector<8x128xf32>
    %254 = vector.extract_strided_slice %5 {offsets = [0, 92], sizes = [8, 36], strides = [1, 1]} : vector<8x128xf32> to vector<8x36xf32>
    %255 = vector.extract_strided_slice %5 {offsets = [0, 0], sizes = [8, 92], strides = [1, 1]} : vector<8x128xf32> to vector<8x92xf32>
    %256 = tpu.concatenate %254, %255 in 1 : vector<8x36xf32>, vector<8x92xf32> -> vector<8x128xf32>
    %257 = vector.extract_strided_slice %3 {offsets = [0, 36], sizes = [8, 1], strides = [1, 1]} : vector<8x51xf32> to vector<8x1xf32>
    %258 = vector.broadcast %257 : vector<8x1xf32> to vector<8x128xf32>
    %259 = arith.mulf %256, %258 : vector<8x128xf32>
    %260 = arith.addf %253, %259 : vector<8x128xf32>
    %261 = vector.extract_strided_slice %5 {offsets = [0, 91], sizes = [8, 37], strides = [1, 1]} : vector<8x128xf32> to vector<8x37xf32>
    %262 = vector.extract_strided_slice %5 {offsets = [0, 0], sizes = [8, 91], strides = [1, 1]} : vector<8x128xf32> to vector<8x91xf32>
    %263 = tpu.concatenate %261, %262 in 1 : vector<8x37xf32>, vector<8x91xf32> -> vector<8x128xf32>
    %264 = vector.extract_strided_slice %3 {offsets = [0, 37], sizes = [8, 1], strides = [1, 1]} : vector<8x51xf32> to vector<8x1xf32>
    %265 = vector.broadcast %264 : vector<8x1xf32> to vector<8x128xf32>
    %266 = arith.mulf %263, %265 : vector<8x128xf32>
    %267 = arith.addf %260, %266 : vector<8x128xf32>
    %268 = vector.extract_strided_slice %5 {offsets = [0, 90], sizes = [8, 38], strides = [1, 1]} : vector<8x128xf32> to vector<8x38xf32>
    %269 = vector.extract_strided_slice %5 {offsets = [0, 0], sizes = [8, 90], strides = [1, 1]} : vector<8x128xf32> to vector<8x90xf32>
    %270 = tpu.concatenate %268, %269 in 1 : vector<8x38xf32>, vector<8x90xf32> -> vector<8x128xf32>
    %271 = vector.extract_strided_slice %3 {offsets = [0, 38], sizes = [8, 1], strides = [1, 1]} : vector<8x51xf32> to vector<8x1xf32>
    %272 = vector.broadcast %271 : vector<8x1xf32> to vector<8x128xf32>
    %273 = arith.mulf %270, %272 : vector<8x128xf32>
    %274 = arith.addf %267, %273 : vector<8x128xf32>
    %275 = vector.extract_strided_slice %5 {offsets = [0, 89], sizes = [8, 39], strides = [1, 1]} : vector<8x128xf32> to vector<8x39xf32>
    %276 = vector.extract_strided_slice %5 {offsets = [0, 0], sizes = [8, 89], strides = [1, 1]} : vector<8x128xf32> to vector<8x89xf32>
    %277 = tpu.concatenate %275, %276 in 1 : vector<8x39xf32>, vector<8x89xf32> -> vector<8x128xf32>
    %278 = vector.extract_strided_slice %3 {offsets = [0, 39], sizes = [8, 1], strides = [1, 1]} : vector<8x51xf32> to vector<8x1xf32>
    %279 = vector.broadcast %278 : vector<8x1xf32> to vector<8x128xf32>
    %280 = arith.mulf %277, %279 : vector<8x128xf32>
    %281 = arith.addf %274, %280 : vector<8x128xf32>
    %282 = vector.extract_strided_slice %5 {offsets = [0, 88], sizes = [8, 40], strides = [1, 1]} : vector<8x128xf32> to vector<8x40xf32>
    %283 = vector.extract_strided_slice %5 {offsets = [0, 0], sizes = [8, 88], strides = [1, 1]} : vector<8x128xf32> to vector<8x88xf32>
    %284 = tpu.concatenate %282, %283 in 1 : vector<8x40xf32>, vector<8x88xf32> -> vector<8x128xf32>
    %285 = vector.extract_strided_slice %3 {offsets = [0, 40], sizes = [8, 1], strides = [1, 1]} : vector<8x51xf32> to vector<8x1xf32>
    %286 = vector.broadcast %285 : vector<8x1xf32> to vector<8x128xf32>
    %287 = arith.mulf %284, %286 : vector<8x128xf32>
    %288 = arith.addf %281, %287 : vector<8x128xf32>
    %289 = vector.extract_strided_slice %5 {offsets = [0, 87], sizes = [8, 41], strides = [1, 1]} : vector<8x128xf32> to vector<8x41xf32>
    %290 = vector.extract_strided_slice %5 {offsets = [0, 0], sizes = [8, 87], strides = [1, 1]} : vector<8x128xf32> to vector<8x87xf32>
    %291 = tpu.concatenate %289, %290 in 1 : vector<8x41xf32>, vector<8x87xf32> -> vector<8x128xf32>
    %292 = vector.extract_strided_slice %3 {offsets = [0, 41], sizes = [8, 1], strides = [1, 1]} : vector<8x51xf32> to vector<8x1xf32>
    %293 = vector.broadcast %292 : vector<8x1xf32> to vector<8x128xf32>
    %294 = arith.mulf %291, %293 : vector<8x128xf32>
    %295 = arith.addf %288, %294 : vector<8x128xf32>
    %296 = vector.extract_strided_slice %5 {offsets = [0, 86], sizes = [8, 42], strides = [1, 1]} : vector<8x128xf32> to vector<8x42xf32>
    %297 = vector.extract_strided_slice %5 {offsets = [0, 0], sizes = [8, 86], strides = [1, 1]} : vector<8x128xf32> to vector<8x86xf32>
    %298 = tpu.concatenate %296, %297 in 1 : vector<8x42xf32>, vector<8x86xf32> -> vector<8x128xf32>
    %299 = vector.extract_strided_slice %3 {offsets = [0, 42], sizes = [8, 1], strides = [1, 1]} : vector<8x51xf32> to vector<8x1xf32>
    %300 = vector.broadcast %299 : vector<8x1xf32> to vector<8x128xf32>
    %301 = arith.mulf %298, %300 : vector<8x128xf32>
    %302 = arith.addf %295, %301 : vector<8x128xf32>
    %303 = vector.extract_strided_slice %5 {offsets = [0, 85], sizes = [8, 43], strides = [1, 1]} : vector<8x128xf32> to vector<8x43xf32>
    %304 = vector.extract_strided_slice %5 {offsets = [0, 0], sizes = [8, 85], strides = [1, 1]} : vector<8x128xf32> to vector<8x85xf32>
    %305 = tpu.concatenate %303, %304 in 1 : vector<8x43xf32>, vector<8x85xf32> -> vector<8x128xf32>
    %306 = vector.extract_strided_slice %3 {offsets = [0, 43], sizes = [8, 1], strides = [1, 1]} : vector<8x51xf32> to vector<8x1xf32>
    %307 = vector.broadcast %306 : vector<8x1xf32> to vector<8x128xf32>
    %308 = arith.mulf %305, %307 : vector<8x128xf32>
    %309 = arith.addf %302, %308 : vector<8x128xf32>
    %310 = vector.extract_strided_slice %5 {offsets = [0, 84], sizes = [8, 44], strides = [1, 1]} : vector<8x128xf32> to vector<8x44xf32>
    %311 = vector.extract_strided_slice %5 {offsets = [0, 0], sizes = [8, 84], strides = [1, 1]} : vector<8x128xf32> to vector<8x84xf32>
    %312 = tpu.concatenate %310, %311 in 1 : vector<8x44xf32>, vector<8x84xf32> -> vector<8x128xf32>
    %313 = vector.extract_strided_slice %3 {offsets = [0, 44], sizes = [8, 1], strides = [1, 1]} : vector<8x51xf32> to vector<8x1xf32>
    %314 = vector.broadcast %313 : vector<8x1xf32> to vector<8x128xf32>
    %315 = arith.mulf %312, %314 : vector<8x128xf32>
    %316 = arith.addf %309, %315 : vector<8x128xf32>
    %317 = vector.extract_strided_slice %5 {offsets = [0, 83], sizes = [8, 45], strides = [1, 1]} : vector<8x128xf32> to vector<8x45xf32>
    %318 = vector.extract_strided_slice %5 {offsets = [0, 0], sizes = [8, 83], strides = [1, 1]} : vector<8x128xf32> to vector<8x83xf32>
    %319 = tpu.concatenate %317, %318 in 1 : vector<8x45xf32>, vector<8x83xf32> -> vector<8x128xf32>
    %320 = vector.extract_strided_slice %3 {offsets = [0, 45], sizes = [8, 1], strides = [1, 1]} : vector<8x51xf32> to vector<8x1xf32>
    %321 = vector.broadcast %320 : vector<8x1xf32> to vector<8x128xf32>
    %322 = arith.mulf %319, %321 : vector<8x128xf32>
    %323 = arith.addf %316, %322 : vector<8x128xf32>
    %324 = vector.extract_strided_slice %5 {offsets = [0, 82], sizes = [8, 46], strides = [1, 1]} : vector<8x128xf32> to vector<8x46xf32>
    %325 = vector.extract_strided_slice %5 {offsets = [0, 0], sizes = [8, 82], strides = [1, 1]} : vector<8x128xf32> to vector<8x82xf32>
    %326 = tpu.concatenate %324, %325 in 1 : vector<8x46xf32>, vector<8x82xf32> -> vector<8x128xf32>
    %327 = vector.extract_strided_slice %3 {offsets = [0, 46], sizes = [8, 1], strides = [1, 1]} : vector<8x51xf32> to vector<8x1xf32>
    %328 = vector.broadcast %327 : vector<8x1xf32> to vector<8x128xf32>
    %329 = arith.mulf %326, %328 : vector<8x128xf32>
    %330 = arith.addf %323, %329 : vector<8x128xf32>
    %331 = vector.extract_strided_slice %5 {offsets = [0, 81], sizes = [8, 47], strides = [1, 1]} : vector<8x128xf32> to vector<8x47xf32>
    %332 = vector.extract_strided_slice %5 {offsets = [0, 0], sizes = [8, 81], strides = [1, 1]} : vector<8x128xf32> to vector<8x81xf32>
    %333 = tpu.concatenate %331, %332 in 1 : vector<8x47xf32>, vector<8x81xf32> -> vector<8x128xf32>
    %334 = vector.extract_strided_slice %3 {offsets = [0, 47], sizes = [8, 1], strides = [1, 1]} : vector<8x51xf32> to vector<8x1xf32>
    %335 = vector.broadcast %334 : vector<8x1xf32> to vector<8x128xf32>
    %336 = arith.mulf %333, %335 : vector<8x128xf32>
    %337 = arith.addf %330, %336 : vector<8x128xf32>
    %338 = vector.extract_strided_slice %5 {offsets = [0, 80], sizes = [8, 48], strides = [1, 1]} : vector<8x128xf32> to vector<8x48xf32>
    %339 = vector.extract_strided_slice %5 {offsets = [0, 0], sizes = [8, 80], strides = [1, 1]} : vector<8x128xf32> to vector<8x80xf32>
    %340 = tpu.concatenate %338, %339 in 1 : vector<8x48xf32>, vector<8x80xf32> -> vector<8x128xf32>
    %341 = vector.extract_strided_slice %3 {offsets = [0, 48], sizes = [8, 1], strides = [1, 1]} : vector<8x51xf32> to vector<8x1xf32>
    %342 = vector.broadcast %341 : vector<8x1xf32> to vector<8x128xf32>
    %343 = arith.mulf %340, %342 : vector<8x128xf32>
    %344 = arith.addf %337, %343 : vector<8x128xf32>
    %345 = vector.extract_strided_slice %5 {offsets = [0, 79], sizes = [8, 49], strides = [1, 1]} : vector<8x128xf32> to vector<8x49xf32>
    %346 = vector.extract_strided_slice %5 {offsets = [0, 0], sizes = [8, 79], strides = [1, 1]} : vector<8x128xf32> to vector<8x79xf32>
    %347 = tpu.concatenate %345, %346 in 1 : vector<8x49xf32>, vector<8x79xf32> -> vector<8x128xf32>
    %348 = vector.extract_strided_slice %3 {offsets = [0, 49], sizes = [8, 1], strides = [1, 1]} : vector<8x51xf32> to vector<8x1xf32>
    %349 = vector.broadcast %348 : vector<8x1xf32> to vector<8x128xf32>
    %350 = arith.mulf %347, %349 : vector<8x128xf32>
    %351 = arith.addf %344, %350 : vector<8x128xf32>
    %352 = vector.extract_strided_slice %5 {offsets = [0, 78], sizes = [8, 50], strides = [1, 1]} : vector<8x128xf32> to vector<8x50xf32>
    %353 = vector.extract_strided_slice %5 {offsets = [0, 0], sizes = [8, 78], strides = [1, 1]} : vector<8x128xf32> to vector<8x78xf32>
    %354 = tpu.concatenate %352, %353 in 1 : vector<8x50xf32>, vector<8x78xf32> -> vector<8x128xf32>
    %355 = vector.extract_strided_slice %3 {offsets = [0, 50], sizes = [8, 1], strides = [1, 1]} : vector<8x51xf32> to vector<8x1xf32>
    %356 = vector.broadcast %355 : vector<8x1xf32> to vector<8x128xf32>
    %357 = arith.mulf %354, %356 : vector<8x128xf32>
    %358 = arith.addf %351, %357 : vector<8x128xf32>
    %c2 = arith.constant 2 : index
    %c0_4 = arith.constant 0 : index
    %c0_5 = arith.constant 0 : index
    %359 = vector.load %arg1[%c2, %c0_4, %c0_5] : memref<3x8x51xf32, #tpu.memory_space<vmem>>, vector<1x8x51xf32>
    %360 = vector.shape_cast %359 : vector<1x8x51xf32> to vector<8x51xf32>
    %cst_6 = arith.constant 0.000000e+00 : f32
    %361 = vector.broadcast %cst_6 : f32 to vector<8x128xf32>
    %362 = tpu.concatenate %358, %361 in 1 : vector<8x128xf32>, vector<8x128xf32> -> vector<8x256xf32>
    %363 = vector.extract_strided_slice %362 {offsets = [0, 0], sizes = [8, 128], strides = [1, 1]} : vector<8x256xf32> to vector<8x128xf32>
    %364 = vector.extract_strided_slice %360 {offsets = [0, 0], sizes = [8, 1], strides = [1, 1]} : vector<8x51xf32> to vector<8x1xf32>
    %365 = vector.broadcast %364 : vector<8x1xf32> to vector<8x128xf32>
    %366 = arith.mulf %363, %365 : vector<8x128xf32>
    %367 = vector.extract_strided_slice %362 {offsets = [0, 0], sizes = [8, 128], strides = [1, 1]} : vector<8x256xf32> to vector<8x128xf32>
    %368 = vector.extract_strided_slice %367 {offsets = [0, 127], sizes = [8, 1], strides = [1, 1]} : vector<8x128xf32> to vector<8x1xf32>
    %369 = vector.extract_strided_slice %367 {offsets = [0, 0], sizes = [8, 127], strides = [1, 1]} : vector<8x128xf32> to vector<8x127xf32>
    %370 = tpu.concatenate %368, %369 in 1 : vector<8x1xf32>, vector<8x127xf32> -> vector<8x128xf32>
    %371 = vector.extract_strided_slice %360 {offsets = [0, 1], sizes = [8, 1], strides = [1, 1]} : vector<8x51xf32> to vector<8x1xf32>
    %372 = vector.broadcast %371 : vector<8x1xf32> to vector<8x128xf32>
    %373 = arith.mulf %370, %372 : vector<8x128xf32>
    %374 = arith.addf %366, %373 : vector<8x128xf32>
    %375 = vector.extract_strided_slice %362 {offsets = [0, 0], sizes = [8, 128], strides = [1, 1]} : vector<8x256xf32> to vector<8x128xf32>
    %376 = vector.extract_strided_slice %375 {offsets = [0, 126], sizes = [8, 2], strides = [1, 1]} : vector<8x128xf32> to vector<8x2xf32>
    %377 = vector.extract_strided_slice %375 {offsets = [0, 0], sizes = [8, 126], strides = [1, 1]} : vector<8x128xf32> to vector<8x126xf32>
    %378 = tpu.concatenate %376, %377 in 1 : vector<8x2xf32>, vector<8x126xf32> -> vector<8x128xf32>
    %379 = vector.extract_strided_slice %360 {offsets = [0, 2], sizes = [8, 1], strides = [1, 1]} : vector<8x51xf32> to vector<8x1xf32>
    %380 = vector.broadcast %379 : vector<8x1xf32> to vector<8x128xf32>
    %381 = arith.mulf %378, %380 : vector<8x128xf32>
    %382 = arith.addf %374, %381 : vector<8x128xf32>
    %383 = vector.extract_strided_slice %362 {offsets = [0, 0], sizes = [8, 128], strides = [1, 1]} : vector<8x256xf32> to vector<8x128xf32>
    %384 = vector.extract_strided_slice %383 {offsets = [0, 125], sizes = [8, 3], strides = [1, 1]} : vector<8x128xf32> to vector<8x3xf32>
    %385 = vector.extract_strided_slice %383 {offsets = [0, 0], sizes = [8, 125], strides = [1, 1]} : vector<8x128xf32> to vector<8x125xf32>
    %386 = tpu.concatenate %384, %385 in 1 : vector<8x3xf32>, vector<8x125xf32> -> vector<8x128xf32>
    %387 = vector.extract_strided_slice %360 {offsets = [0, 3], sizes = [8, 1], strides = [1, 1]} : vector<8x51xf32> to vector<8x1xf32>
    %388 = vector.broadcast %387 : vector<8x1xf32> to vector<8x128xf32>
    %389 = arith.mulf %386, %388 : vector<8x128xf32>
    %390 = arith.addf %382, %389 : vector<8x128xf32>
    %391 = vector.extract_strided_slice %362 {offsets = [0, 0], sizes = [8, 128], strides = [1, 1]} : vector<8x256xf32> to vector<8x128xf32>
    %392 = vector.extract_strided_slice %391 {offsets = [0, 124], sizes = [8, 4], strides = [1, 1]} : vector<8x128xf32> to vector<8x4xf32>
    %393 = vector.extract_strided_slice %391 {offsets = [0, 0], sizes = [8, 124], strides = [1, 1]} : vector<8x128xf32> to vector<8x124xf32>
    %394 = tpu.concatenate %392, %393 in 1 : vector<8x4xf32>, vector<8x124xf32> -> vector<8x128xf32>
    %395 = vector.extract_strided_slice %360 {offsets = [0, 4], sizes = [8, 1], strides = [1, 1]} : vector<8x51xf32> to vector<8x1xf32>
    %396 = vector.broadcast %395 : vector<8x1xf32> to vector<8x128xf32>
    %397 = arith.mulf %394, %396 : vector<8x128xf32>
    %398 = arith.addf %390, %397 : vector<8x128xf32>
    %399 = vector.extract_strided_slice %362 {offsets = [0, 0], sizes = [8, 128], strides = [1, 1]} : vector<8x256xf32> to vector<8x128xf32>
    %400 = vector.extract_strided_slice %399 {offsets = [0, 123], sizes = [8, 5], strides = [1, 1]} : vector<8x128xf32> to vector<8x5xf32>
    %401 = vector.extract_strided_slice %399 {offsets = [0, 0], sizes = [8, 123], strides = [1, 1]} : vector<8x128xf32> to vector<8x123xf32>
    %402 = tpu.concatenate %400, %401 in 1 : vector<8x5xf32>, vector<8x123xf32> -> vector<8x128xf32>
    %403 = vector.extract_strided_slice %360 {offsets = [0, 5], sizes = [8, 1], strides = [1, 1]} : vector<8x51xf32> to vector<8x1xf32>
    %404 = vector.broadcast %403 : vector<8x1xf32> to vector<8x128xf32>
    %405 = arith.mulf %402, %404 : vector<8x128xf32>
    %406 = arith.addf %398, %405 : vector<8x128xf32>
    %407 = vector.extract_strided_slice %362 {offsets = [0, 0], sizes = [8, 128], strides = [1, 1]} : vector<8x256xf32> to vector<8x128xf32>
    %408 = vector.extract_strided_slice %407 {offsets = [0, 122], sizes = [8, 6], strides = [1, 1]} : vector<8x128xf32> to vector<8x6xf32>
    %409 = vector.extract_strided_slice %407 {offsets = [0, 0], sizes = [8, 122], strides = [1, 1]} : vector<8x128xf32> to vector<8x122xf32>
    %410 = tpu.concatenate %408, %409 in 1 : vector<8x6xf32>, vector<8x122xf32> -> vector<8x128xf32>
    %411 = vector.extract_strided_slice %360 {offsets = [0, 6], sizes = [8, 1], strides = [1, 1]} : vector<8x51xf32> to vector<8x1xf32>
    %412 = vector.broadcast %411 : vector<8x1xf32> to vector<8x128xf32>
    %413 = arith.mulf %410, %412 : vector<8x128xf32>
    %414 = arith.addf %406, %413 : vector<8x128xf32>
    %415 = vector.extract_strided_slice %362 {offsets = [0, 0], sizes = [8, 128], strides = [1, 1]} : vector<8x256xf32> to vector<8x128xf32>
    %416 = vector.extract_strided_slice %415 {offsets = [0, 121], sizes = [8, 7], strides = [1, 1]} : vector<8x128xf32> to vector<8x7xf32>
    %417 = vector.extract_strided_slice %415 {offsets = [0, 0], sizes = [8, 121], strides = [1, 1]} : vector<8x128xf32> to vector<8x121xf32>
    %418 = tpu.concatenate %416, %417 in 1 : vector<8x7xf32>, vector<8x121xf32> -> vector<8x128xf32>
    %419 = vector.extract_strided_slice %360 {offsets = [0, 7], sizes = [8, 1], strides = [1, 1]} : vector<8x51xf32> to vector<8x1xf32>
    %420 = vector.broadcast %419 : vector<8x1xf32> to vector<8x128xf32>
    %421 = arith.mulf %418, %420 : vector<8x128xf32>
    %422 = arith.addf %414, %421 : vector<8x128xf32>
    %423 = vector.extract_strided_slice %362 {offsets = [0, 0], sizes = [8, 128], strides = [1, 1]} : vector<8x256xf32> to vector<8x128xf32>
    %424 = vector.extract_strided_slice %423 {offsets = [0, 120], sizes = [8, 8], strides = [1, 1]} : vector<8x128xf32> to vector<8x8xf32>
    %425 = vector.extract_strided_slice %423 {offsets = [0, 0], sizes = [8, 120], strides = [1, 1]} : vector<8x128xf32> to vector<8x120xf32>
    %426 = tpu.concatenate %424, %425 in 1 : vector<8x8xf32>, vector<8x120xf32> -> vector<8x128xf32>
    %427 = vector.extract_strided_slice %360 {offsets = [0, 8], sizes = [8, 1], strides = [1, 1]} : vector<8x51xf32> to vector<8x1xf32>
    %428 = vector.broadcast %427 : vector<8x1xf32> to vector<8x128xf32>
    %429 = arith.mulf %426, %428 : vector<8x128xf32>
    %430 = arith.addf %422, %429 : vector<8x128xf32>
    %431 = vector.extract_strided_slice %362 {offsets = [0, 0], sizes = [8, 128], strides = [1, 1]} : vector<8x256xf32> to vector<8x128xf32>
    %432 = vector.extract_strided_slice %431 {offsets = [0, 119], sizes = [8, 9], strides = [1, 1]} : vector<8x128xf32> to vector<8x9xf32>
    %433 = vector.extract_strided_slice %431 {offsets = [0, 0], sizes = [8, 119], strides = [1, 1]} : vector<8x128xf32> to vector<8x119xf32>
    %434 = tpu.concatenate %432, %433 in 1 : vector<8x9xf32>, vector<8x119xf32> -> vector<8x128xf32>
    %435 = vector.extract_strided_slice %360 {offsets = [0, 9], sizes = [8, 1], strides = [1, 1]} : vector<8x51xf32> to vector<8x1xf32>
    %436 = vector.broadcast %435 : vector<8x1xf32> to vector<8x128xf32>
    %437 = arith.mulf %434, %436 : vector<8x128xf32>
    %438 = arith.addf %430, %437 : vector<8x128xf32>
    %439 = vector.extract_strided_slice %362 {offsets = [0, 0], sizes = [8, 128], strides = [1, 1]} : vector<8x256xf32> to vector<8x128xf32>
    %440 = vector.extract_strided_slice %439 {offsets = [0, 118], sizes = [8, 10], strides = [1, 1]} : vector<8x128xf32> to vector<8x10xf32>
    %441 = vector.extract_strided_slice %439 {offsets = [0, 0], sizes = [8, 118], strides = [1, 1]} : vector<8x128xf32> to vector<8x118xf32>
    %442 = tpu.concatenate %440, %441 in 1 : vector<8x10xf32>, vector<8x118xf32> -> vector<8x128xf32>
    %443 = vector.extract_strided_slice %360 {offsets = [0, 10], sizes = [8, 1], strides = [1, 1]} : vector<8x51xf32> to vector<8x1xf32>
    %444 = vector.broadcast %443 : vector<8x1xf32> to vector<8x128xf32>
    %445 = arith.mulf %442, %444 : vector<8x128xf32>
    %446 = arith.addf %438, %445 : vector<8x128xf32>
    %447 = vector.extract_strided_slice %362 {offsets = [0, 0], sizes = [8, 128], strides = [1, 1]} : vector<8x256xf32> to vector<8x128xf32>
    %448 = vector.extract_strided_slice %447 {offsets = [0, 117], sizes = [8, 11], strides = [1, 1]} : vector<8x128xf32> to vector<8x11xf32>
    %449 = vector.extract_strided_slice %447 {offsets = [0, 0], sizes = [8, 117], strides = [1, 1]} : vector<8x128xf32> to vector<8x117xf32>
    %450 = tpu.concatenate %448, %449 in 1 : vector<8x11xf32>, vector<8x117xf32> -> vector<8x128xf32>
    %451 = vector.extract_strided_slice %360 {offsets = [0, 11], sizes = [8, 1], strides = [1, 1]} : vector<8x51xf32> to vector<8x1xf32>
    %452 = vector.broadcast %451 : vector<8x1xf32> to vector<8x128xf32>
    %453 = arith.mulf %450, %452 : vector<8x128xf32>
    %454 = arith.addf %446, %453 : vector<8x128xf32>
    %455 = vector.extract_strided_slice %362 {offsets = [0, 0], sizes = [8, 128], strides = [1, 1]} : vector<8x256xf32> to vector<8x128xf32>
    %456 = vector.extract_strided_slice %455 {offsets = [0, 116], sizes = [8, 12], strides = [1, 1]} : vector<8x128xf32> to vector<8x12xf32>
    %457 = vector.extract_strided_slice %455 {offsets = [0, 0], sizes = [8, 116], strides = [1, 1]} : vector<8x128xf32> to vector<8x116xf32>
    %458 = tpu.concatenate %456, %457 in 1 : vector<8x12xf32>, vector<8x116xf32> -> vector<8x128xf32>
    %459 = vector.extract_strided_slice %360 {offsets = [0, 12], sizes = [8, 1], strides = [1, 1]} : vector<8x51xf32> to vector<8x1xf32>
    %460 = vector.broadcast %459 : vector<8x1xf32> to vector<8x128xf32>
    %461 = arith.mulf %458, %460 : vector<8x128xf32>
    %462 = arith.addf %454, %461 : vector<8x128xf32>
    %463 = vector.extract_strided_slice %362 {offsets = [0, 0], sizes = [8, 128], strides = [1, 1]} : vector<8x256xf32> to vector<8x128xf32>
    %464 = vector.extract_strided_slice %463 {offsets = [0, 115], sizes = [8, 13], strides = [1, 1]} : vector<8x128xf32> to vector<8x13xf32>
    %465 = vector.extract_strided_slice %463 {offsets = [0, 0], sizes = [8, 115], strides = [1, 1]} : vector<8x128xf32> to vector<8x115xf32>
    %466 = tpu.concatenate %464, %465 in 1 : vector<8x13xf32>, vector<8x115xf32> -> vector<8x128xf32>
    %467 = vector.extract_strided_slice %360 {offsets = [0, 13], sizes = [8, 1], strides = [1, 1]} : vector<8x51xf32> to vector<8x1xf32>
    %468 = vector.broadcast %467 : vector<8x1xf32> to vector<8x128xf32>
    %469 = arith.mulf %466, %468 : vector<8x128xf32>
    %470 = arith.addf %462, %469 : vector<8x128xf32>
    %471 = vector.extract_strided_slice %362 {offsets = [0, 0], sizes = [8, 128], strides = [1, 1]} : vector<8x256xf32> to vector<8x128xf32>
    %472 = vector.extract_strided_slice %471 {offsets = [0, 114], sizes = [8, 14], strides = [1, 1]} : vector<8x128xf32> to vector<8x14xf32>
    %473 = vector.extract_strided_slice %471 {offsets = [0, 0], sizes = [8, 114], strides = [1, 1]} : vector<8x128xf32> to vector<8x114xf32>
    %474 = tpu.concatenate %472, %473 in 1 : vector<8x14xf32>, vector<8x114xf32> -> vector<8x128xf32>
    %475 = vector.extract_strided_slice %360 {offsets = [0, 14], sizes = [8, 1], strides = [1, 1]} : vector<8x51xf32> to vector<8x1xf32>
    %476 = vector.broadcast %475 : vector<8x1xf32> to vector<8x128xf32>
    %477 = arith.mulf %474, %476 : vector<8x128xf32>
    %478 = arith.addf %470, %477 : vector<8x128xf32>
    %479 = vector.extract_strided_slice %362 {offsets = [0, 0], sizes = [8, 128], strides = [1, 1]} : vector<8x256xf32> to vector<8x128xf32>
    %480 = vector.extract_strided_slice %479 {offsets = [0, 113], sizes = [8, 15], strides = [1, 1]} : vector<8x128xf32> to vector<8x15xf32>
    %481 = vector.extract_strided_slice %479 {offsets = [0, 0], sizes = [8, 113], strides = [1, 1]} : vector<8x128xf32> to vector<8x113xf32>
    %482 = tpu.concatenate %480, %481 in 1 : vector<8x15xf32>, vector<8x113xf32> -> vector<8x128xf32>
    %483 = vector.extract_strided_slice %360 {offsets = [0, 15], sizes = [8, 1], strides = [1, 1]} : vector<8x51xf32> to vector<8x1xf32>
    %484 = vector.broadcast %483 : vector<8x1xf32> to vector<8x128xf32>
    %485 = arith.mulf %482, %484 : vector<8x128xf32>
    %486 = arith.addf %478, %485 : vector<8x128xf32>
    %487 = vector.extract_strided_slice %362 {offsets = [0, 0], sizes = [8, 128], strides = [1, 1]} : vector<8x256xf32> to vector<8x128xf32>
    %488 = vector.extract_strided_slice %487 {offsets = [0, 112], sizes = [8, 16], strides = [1, 1]} : vector<8x128xf32> to vector<8x16xf32>
    %489 = vector.extract_strided_slice %487 {offsets = [0, 0], sizes = [8, 112], strides = [1, 1]} : vector<8x128xf32> to vector<8x112xf32>
    %490 = tpu.concatenate %488, %489 in 1 : vector<8x16xf32>, vector<8x112xf32> -> vector<8x128xf32>
    %491 = vector.extract_strided_slice %360 {offsets = [0, 16], sizes = [8, 1], strides = [1, 1]} : vector<8x51xf32> to vector<8x1xf32>
    %492 = vector.broadcast %491 : vector<8x1xf32> to vector<8x128xf32>
    %493 = arith.mulf %490, %492 : vector<8x128xf32>
    %494 = arith.addf %486, %493 : vector<8x128xf32>
    %495 = vector.extract_strided_slice %362 {offsets = [0, 0], sizes = [8, 128], strides = [1, 1]} : vector<8x256xf32> to vector<8x128xf32>
    %496 = vector.extract_strided_slice %495 {offsets = [0, 111], sizes = [8, 17], strides = [1, 1]} : vector<8x128xf32> to vector<8x17xf32>
    %497 = vector.extract_strided_slice %495 {offsets = [0, 0], sizes = [8, 111], strides = [1, 1]} : vector<8x128xf32> to vector<8x111xf32>
    %498 = tpu.concatenate %496, %497 in 1 : vector<8x17xf32>, vector<8x111xf32> -> vector<8x128xf32>
    %499 = vector.extract_strided_slice %360 {offsets = [0, 17], sizes = [8, 1], strides = [1, 1]} : vector<8x51xf32> to vector<8x1xf32>
    %500 = vector.broadcast %499 : vector<8x1xf32> to vector<8x128xf32>
    %501 = arith.mulf %498, %500 : vector<8x128xf32>
    %502 = arith.addf %494, %501 : vector<8x128xf32>
    %503 = vector.extract_strided_slice %362 {offsets = [0, 0], sizes = [8, 128], strides = [1, 1]} : vector<8x256xf32> to vector<8x128xf32>
    %504 = vector.extract_strided_slice %503 {offsets = [0, 110], sizes = [8, 18], strides = [1, 1]} : vector<8x128xf32> to vector<8x18xf32>
    %505 = vector.extract_strided_slice %503 {offsets = [0, 0], sizes = [8, 110], strides = [1, 1]} : vector<8x128xf32> to vector<8x110xf32>
    %506 = tpu.concatenate %504, %505 in 1 : vector<8x18xf32>, vector<8x110xf32> -> vector<8x128xf32>
    %507 = vector.extract_strided_slice %360 {offsets = [0, 18], sizes = [8, 1], strides = [1, 1]} : vector<8x51xf32> to vector<8x1xf32>
    %508 = vector.broadcast %507 : vector<8x1xf32> to vector<8x128xf32>
    %509 = arith.mulf %506, %508 : vector<8x128xf32>
    %510 = arith.addf %502, %509 : vector<8x128xf32>
    %511 = vector.extract_strided_slice %362 {offsets = [0, 0], sizes = [8, 128], strides = [1, 1]} : vector<8x256xf32> to vector<8x128xf32>
    %512 = vector.extract_strided_slice %511 {offsets = [0, 109], sizes = [8, 19], strides = [1, 1]} : vector<8x128xf32> to vector<8x19xf32>
    %513 = vector.extract_strided_slice %511 {offsets = [0, 0], sizes = [8, 109], strides = [1, 1]} : vector<8x128xf32> to vector<8x109xf32>
    %514 = tpu.concatenate %512, %513 in 1 : vector<8x19xf32>, vector<8x109xf32> -> vector<8x128xf32>
    %515 = vector.extract_strided_slice %360 {offsets = [0, 19], sizes = [8, 1], strides = [1, 1]} : vector<8x51xf32> to vector<8x1xf32>
    %516 = vector.broadcast %515 : vector<8x1xf32> to vector<8x128xf32>
    %517 = arith.mulf %514, %516 : vector<8x128xf32>
    %518 = arith.addf %510, %517 : vector<8x128xf32>
    %519 = vector.extract_strided_slice %362 {offsets = [0, 0], sizes = [8, 128], strides = [1, 1]} : vector<8x256xf32> to vector<8x128xf32>
    %520 = vector.extract_strided_slice %519 {offsets = [0, 108], sizes = [8, 20], strides = [1, 1]} : vector<8x128xf32> to vector<8x20xf32>
    %521 = vector.extract_strided_slice %519 {offsets = [0, 0], sizes = [8, 108], strides = [1, 1]} : vector<8x128xf32> to vector<8x108xf32>
    %522 = tpu.concatenate %520, %521 in 1 : vector<8x20xf32>, vector<8x108xf32> -> vector<8x128xf32>
    %523 = vector.extract_strided_slice %360 {offsets = [0, 20], sizes = [8, 1], strides = [1, 1]} : vector<8x51xf32> to vector<8x1xf32>
    %524 = vector.broadcast %523 : vector<8x1xf32> to vector<8x128xf32>
    %525 = arith.mulf %522, %524 : vector<8x128xf32>
    %526 = arith.addf %518, %525 : vector<8x128xf32>
    %527 = vector.extract_strided_slice %362 {offsets = [0, 0], sizes = [8, 128], strides = [1, 1]} : vector<8x256xf32> to vector<8x128xf32>
    %528 = vector.extract_strided_slice %527 {offsets = [0, 107], sizes = [8, 21], strides = [1, 1]} : vector<8x128xf32> to vector<8x21xf32>
    %529 = vector.extract_strided_slice %527 {offsets = [0, 0], sizes = [8, 107], strides = [1, 1]} : vector<8x128xf32> to vector<8x107xf32>
    %530 = tpu.concatenate %528, %529 in 1 : vector<8x21xf32>, vector<8x107xf32> -> vector<8x128xf32>
    %531 = vector.extract_strided_slice %360 {offsets = [0, 21], sizes = [8, 1], strides = [1, 1]} : vector<8x51xf32> to vector<8x1xf32>
    %532 = vector.broadcast %531 : vector<8x1xf32> to vector<8x128xf32>
    %533 = arith.mulf %530, %532 : vector<8x128xf32>
    %534 = arith.addf %526, %533 : vector<8x128xf32>
    %535 = vector.extract_strided_slice %362 {offsets = [0, 0], sizes = [8, 128], strides = [1, 1]} : vector<8x256xf32> to vector<8x128xf32>
    %536 = vector.extract_strided_slice %535 {offsets = [0, 106], sizes = [8, 22], strides = [1, 1]} : vector<8x128xf32> to vector<8x22xf32>
    %537 = vector.extract_strided_slice %535 {offsets = [0, 0], sizes = [8, 106], strides = [1, 1]} : vector<8x128xf32> to vector<8x106xf32>
    %538 = tpu.concatenate %536, %537 in 1 : vector<8x22xf32>, vector<8x106xf32> -> vector<8x128xf32>
    %539 = vector.extract_strided_slice %360 {offsets = [0, 22], sizes = [8, 1], strides = [1, 1]} : vector<8x51xf32> to vector<8x1xf32>
    %540 = vector.broadcast %539 : vector<8x1xf32> to vector<8x128xf32>
    %541 = arith.mulf %538, %540 : vector<8x128xf32>
    %542 = arith.addf %534, %541 : vector<8x128xf32>
    %543 = vector.extract_strided_slice %362 {offsets = [0, 0], sizes = [8, 128], strides = [1, 1]} : vector<8x256xf32> to vector<8x128xf32>
    %544 = vector.extract_strided_slice %543 {offsets = [0, 105], sizes = [8, 23], strides = [1, 1]} : vector<8x128xf32> to vector<8x23xf32>
    %545 = vector.extract_strided_slice %543 {offsets = [0, 0], sizes = [8, 105], strides = [1, 1]} : vector<8x128xf32> to vector<8x105xf32>
    %546 = tpu.concatenate %544, %545 in 1 : vector<8x23xf32>, vector<8x105xf32> -> vector<8x128xf32>
    %547 = vector.extract_strided_slice %360 {offsets = [0, 23], sizes = [8, 1], strides = [1, 1]} : vector<8x51xf32> to vector<8x1xf32>
    %548 = vector.broadcast %547 : vector<8x1xf32> to vector<8x128xf32>
    %549 = arith.mulf %546, %548 : vector<8x128xf32>
    %550 = arith.addf %542, %549 : vector<8x128xf32>
    %551 = vector.extract_strided_slice %362 {offsets = [0, 0], sizes = [8, 128], strides = [1, 1]} : vector<8x256xf32> to vector<8x128xf32>
    %552 = vector.extract_strided_slice %551 {offsets = [0, 104], sizes = [8, 24], strides = [1, 1]} : vector<8x128xf32> to vector<8x24xf32>
    %553 = vector.extract_strided_slice %551 {offsets = [0, 0], sizes = [8, 104], strides = [1, 1]} : vector<8x128xf32> to vector<8x104xf32>
    %554 = tpu.concatenate %552, %553 in 1 : vector<8x24xf32>, vector<8x104xf32> -> vector<8x128xf32>
    %555 = vector.extract_strided_slice %360 {offsets = [0, 24], sizes = [8, 1], strides = [1, 1]} : vector<8x51xf32> to vector<8x1xf32>
    %556 = vector.broadcast %555 : vector<8x1xf32> to vector<8x128xf32>
    %557 = arith.mulf %554, %556 : vector<8x128xf32>
    %558 = arith.addf %550, %557 : vector<8x128xf32>
    %559 = vector.extract_strided_slice %362 {offsets = [0, 0], sizes = [8, 128], strides = [1, 1]} : vector<8x256xf32> to vector<8x128xf32>
    %560 = vector.extract_strided_slice %559 {offsets = [0, 103], sizes = [8, 25], strides = [1, 1]} : vector<8x128xf32> to vector<8x25xf32>
    %561 = vector.extract_strided_slice %559 {offsets = [0, 0], sizes = [8, 103], strides = [1, 1]} : vector<8x128xf32> to vector<8x103xf32>
    %562 = tpu.concatenate %560, %561 in 1 : vector<8x25xf32>, vector<8x103xf32> -> vector<8x128xf32>
    %563 = vector.extract_strided_slice %360 {offsets = [0, 25], sizes = [8, 1], strides = [1, 1]} : vector<8x51xf32> to vector<8x1xf32>
    %564 = vector.broadcast %563 : vector<8x1xf32> to vector<8x128xf32>
    %565 = arith.mulf %562, %564 : vector<8x128xf32>
    %566 = arith.addf %558, %565 : vector<8x128xf32>
    %567 = vector.extract_strided_slice %362 {offsets = [0, 0], sizes = [8, 128], strides = [1, 1]} : vector<8x256xf32> to vector<8x128xf32>
    %568 = vector.extract_strided_slice %567 {offsets = [0, 102], sizes = [8, 26], strides = [1, 1]} : vector<8x128xf32> to vector<8x26xf32>
    %569 = vector.extract_strided_slice %567 {offsets = [0, 0], sizes = [8, 102], strides = [1, 1]} : vector<8x128xf32> to vector<8x102xf32>
    %570 = tpu.concatenate %568, %569 in 1 : vector<8x26xf32>, vector<8x102xf32> -> vector<8x128xf32>
    %571 = vector.extract_strided_slice %360 {offsets = [0, 26], sizes = [8, 1], strides = [1, 1]} : vector<8x51xf32> to vector<8x1xf32>
    %572 = vector.broadcast %571 : vector<8x1xf32> to vector<8x128xf32>
    %573 = arith.mulf %570, %572 : vector<8x128xf32>
    %574 = arith.addf %566, %573 : vector<8x128xf32>
    %575 = vector.extract_strided_slice %362 {offsets = [0, 0], sizes = [8, 128], strides = [1, 1]} : vector<8x256xf32> to vector<8x128xf32>
    %576 = vector.extract_strided_slice %575 {offsets = [0, 101], sizes = [8, 27], strides = [1, 1]} : vector<8x128xf32> to vector<8x27xf32>
    %577 = vector.extract_strided_slice %575 {offsets = [0, 0], sizes = [8, 101], strides = [1, 1]} : vector<8x128xf32> to vector<8x101xf32>
    %578 = tpu.concatenate %576, %577 in 1 : vector<8x27xf32>, vector<8x101xf32> -> vector<8x128xf32>
    %579 = vector.extract_strided_slice %360 {offsets = [0, 27], sizes = [8, 1], strides = [1, 1]} : vector<8x51xf32> to vector<8x1xf32>
    %580 = vector.broadcast %579 : vector<8x1xf32> to vector<8x128xf32>
    %581 = arith.mulf %578, %580 : vector<8x128xf32>
    %582 = arith.addf %574, %581 : vector<8x128xf32>
    %583 = vector.extract_strided_slice %362 {offsets = [0, 228], sizes = [8, 28], strides = [1, 1]} : vector<8x256xf32> to vector<8x28xf32>
    %584 = vector.extract_strided_slice %362 {offsets = [0, 0], sizes = [8, 228], strides = [1, 1]} : vector<8x256xf32> to vector<8x228xf32>
    %585 = tpu.concatenate %583, %584 in 1 : vector<8x28xf32>, vector<8x228xf32> -> vector<8x256xf32>
    %586 = vector.extract_strided_slice %360 {offsets = [0, 28], sizes = [8, 1], strides = [1, 1]} : vector<8x51xf32> to vector<8x1xf32>
    %587 = vector.broadcast %586 : vector<8x1xf32> to vector<8x256xf32>
    %588 = arith.mulf %585, %587 : vector<8x256xf32>
    %589 = vector.extract_strided_slice %588 {offsets = [0, 0], sizes = [8, 128], strides = [1, 1]} : vector<8x256xf32> to vector<8x128xf32>
    %590 = arith.addf %582, %589 : vector<8x128xf32>
    %591 = vector.extract_strided_slice %588 {offsets = [0, 128], sizes = [8, 128], strides = [1, 1]} : vector<8x256xf32> to vector<8x128xf32>
    %592 = vector.extract_strided_slice %362 {offsets = [0, 227], sizes = [8, 29], strides = [1, 1]} : vector<8x256xf32> to vector<8x29xf32>
    %593 = vector.extract_strided_slice %362 {offsets = [0, 0], sizes = [8, 227], strides = [1, 1]} : vector<8x256xf32> to vector<8x227xf32>
    %594 = tpu.concatenate %592, %593 in 1 : vector<8x29xf32>, vector<8x227xf32> -> vector<8x256xf32>
    %595 = vector.extract_strided_slice %360 {offsets = [0, 29], sizes = [8, 1], strides = [1, 1]} : vector<8x51xf32> to vector<8x1xf32>
    %596 = vector.broadcast %595 : vector<8x1xf32> to vector<8x256xf32>
    %597 = arith.mulf %594, %596 : vector<8x256xf32>
    %598 = vector.extract_strided_slice %597 {offsets = [0, 0], sizes = [8, 128], strides = [1, 1]} : vector<8x256xf32> to vector<8x128xf32>
    %599 = arith.addf %590, %598 : vector<8x128xf32>
    %600 = vector.extract_strided_slice %597 {offsets = [0, 128], sizes = [8, 128], strides = [1, 1]} : vector<8x256xf32> to vector<8x128xf32>
    %601 = arith.addf %591, %600 : vector<8x128xf32>
    %602 = vector.extract_strided_slice %362 {offsets = [0, 226], sizes = [8, 30], strides = [1, 1]} : vector<8x256xf32> to vector<8x30xf32>
    %603 = vector.extract_strided_slice %362 {offsets = [0, 0], sizes = [8, 226], strides = [1, 1]} : vector<8x256xf32> to vector<8x226xf32>
    %604 = tpu.concatenate %602, %603 in 1 : vector<8x30xf32>, vector<8x226xf32> -> vector<8x256xf32>
    %605 = vector.extract_strided_slice %360 {offsets = [0, 30], sizes = [8, 1], strides = [1, 1]} : vector<8x51xf32> to vector<8x1xf32>
    %606 = vector.broadcast %605 : vector<8x1xf32> to vector<8x256xf32>
    %607 = arith.mulf %604, %606 : vector<8x256xf32>
    %608 = vector.extract_strided_slice %607 {offsets = [0, 0], sizes = [8, 128], strides = [1, 1]} : vector<8x256xf32> to vector<8x128xf32>
    %609 = arith.addf %599, %608 : vector<8x128xf32>
    %610 = vector.extract_strided_slice %607 {offsets = [0, 128], sizes = [8, 128], strides = [1, 1]} : vector<8x256xf32> to vector<8x128xf32>
    %611 = arith.addf %601, %610 : vector<8x128xf32>
    %612 = vector.extract_strided_slice %362 {offsets = [0, 225], sizes = [8, 31], strides = [1, 1]} : vector<8x256xf32> to vector<8x31xf32>
    %613 = vector.extract_strided_slice %362 {offsets = [0, 0], sizes = [8, 225], strides = [1, 1]} : vector<8x256xf32> to vector<8x225xf32>
    %614 = tpu.concatenate %612, %613 in 1 : vector<8x31xf32>, vector<8x225xf32> -> vector<8x256xf32>
    %615 = vector.extract_strided_slice %360 {offsets = [0, 31], sizes = [8, 1], strides = [1, 1]} : vector<8x51xf32> to vector<8x1xf32>
    %616 = vector.broadcast %615 : vector<8x1xf32> to vector<8x256xf32>
    %617 = arith.mulf %614, %616 : vector<8x256xf32>
    %618 = vector.extract_strided_slice %617 {offsets = [0, 0], sizes = [8, 128], strides = [1, 1]} : vector<8x256xf32> to vector<8x128xf32>
    %619 = arith.addf %609, %618 : vector<8x128xf32>
    %620 = vector.extract_strided_slice %617 {offsets = [0, 128], sizes = [8, 128], strides = [1, 1]} : vector<8x256xf32> to vector<8x128xf32>
    %621 = arith.addf %611, %620 : vector<8x128xf32>
    %622 = vector.extract_strided_slice %362 {offsets = [0, 224], sizes = [8, 32], strides = [1, 1]} : vector<8x256xf32> to vector<8x32xf32>
    %623 = vector.extract_strided_slice %362 {offsets = [0, 0], sizes = [8, 224], strides = [1, 1]} : vector<8x256xf32> to vector<8x224xf32>
    %624 = tpu.concatenate %622, %623 in 1 : vector<8x32xf32>, vector<8x224xf32> -> vector<8x256xf32>
    %625 = vector.extract_strided_slice %360 {offsets = [0, 32], sizes = [8, 1], strides = [1, 1]} : vector<8x51xf32> to vector<8x1xf32>
    %626 = vector.broadcast %625 : vector<8x1xf32> to vector<8x256xf32>
    %627 = arith.mulf %624, %626 : vector<8x256xf32>
    %628 = vector.extract_strided_slice %627 {offsets = [0, 0], sizes = [8, 128], strides = [1, 1]} : vector<8x256xf32> to vector<8x128xf32>
    %629 = arith.addf %619, %628 : vector<8x128xf32>
    %630 = vector.extract_strided_slice %627 {offsets = [0, 128], sizes = [8, 128], strides = [1, 1]} : vector<8x256xf32> to vector<8x128xf32>
    %631 = arith.addf %621, %630 : vector<8x128xf32>
    %632 = vector.extract_strided_slice %362 {offsets = [0, 223], sizes = [8, 33], strides = [1, 1]} : vector<8x256xf32> to vector<8x33xf32>
    %633 = vector.extract_strided_slice %362 {offsets = [0, 0], sizes = [8, 223], strides = [1, 1]} : vector<8x256xf32> to vector<8x223xf32>
    %634 = tpu.concatenate %632, %633 in 1 : vector<8x33xf32>, vector<8x223xf32> -> vector<8x256xf32>
    %635 = vector.extract_strided_slice %360 {offsets = [0, 33], sizes = [8, 1], strides = [1, 1]} : vector<8x51xf32> to vector<8x1xf32>
    %636 = vector.broadcast %635 : vector<8x1xf32> to vector<8x256xf32>
    %637 = arith.mulf %634, %636 : vector<8x256xf32>
    %638 = vector.extract_strided_slice %637 {offsets = [0, 0], sizes = [8, 128], strides = [1, 1]} : vector<8x256xf32> to vector<8x128xf32>
    %639 = arith.addf %629, %638 : vector<8x128xf32>
    %640 = vector.extract_strided_slice %637 {offsets = [0, 128], sizes = [8, 128], strides = [1, 1]} : vector<8x256xf32> to vector<8x128xf32>
    %641 = arith.addf %631, %640 : vector<8x128xf32>
    %642 = vector.extract_strided_slice %362 {offsets = [0, 222], sizes = [8, 34], strides = [1, 1]} : vector<8x256xf32> to vector<8x34xf32>
    %643 = vector.extract_strided_slice %362 {offsets = [0, 0], sizes = [8, 222], strides = [1, 1]} : vector<8x256xf32> to vector<8x222xf32>
    %644 = tpu.concatenate %642, %643 in 1 : vector<8x34xf32>, vector<8x222xf32> -> vector<8x256xf32>
    %645 = vector.extract_strided_slice %360 {offsets = [0, 34], sizes = [8, 1], strides = [1, 1]} : vector<8x51xf32> to vector<8x1xf32>
    %646 = vector.broadcast %645 : vector<8x1xf32> to vector<8x256xf32>
    %647 = arith.mulf %644, %646 : vector<8x256xf32>
    %648 = vector.extract_strided_slice %647 {offsets = [0, 0], sizes = [8, 128], strides = [1, 1]} : vector<8x256xf32> to vector<8x128xf32>
    %649 = arith.addf %639, %648 : vector<8x128xf32>
    %650 = vector.extract_strided_slice %647 {offsets = [0, 128], sizes = [8, 128], strides = [1, 1]} : vector<8x256xf32> to vector<8x128xf32>
    %651 = arith.addf %641, %650 : vector<8x128xf32>
    %652 = vector.extract_strided_slice %362 {offsets = [0, 221], sizes = [8, 35], strides = [1, 1]} : vector<8x256xf32> to vector<8x35xf32>
    %653 = vector.extract_strided_slice %362 {offsets = [0, 0], sizes = [8, 221], strides = [1, 1]} : vector<8x256xf32> to vector<8x221xf32>
    %654 = tpu.concatenate %652, %653 in 1 : vector<8x35xf32>, vector<8x221xf32> -> vector<8x256xf32>
    %655 = vector.extract_strided_slice %360 {offsets = [0, 35], sizes = [8, 1], strides = [1, 1]} : vector<8x51xf32> to vector<8x1xf32>
    %656 = vector.broadcast %655 : vector<8x1xf32> to vector<8x256xf32>
    %657 = arith.mulf %654, %656 : vector<8x256xf32>
    %658 = vector.extract_strided_slice %657 {offsets = [0, 0], sizes = [8, 128], strides = [1, 1]} : vector<8x256xf32> to vector<8x128xf32>
    %659 = arith.addf %649, %658 : vector<8x128xf32>
    %660 = vector.extract_strided_slice %657 {offsets = [0, 128], sizes = [8, 128], strides = [1, 1]} : vector<8x256xf32> to vector<8x128xf32>
    %661 = arith.addf %651, %660 : vector<8x128xf32>
    %662 = vector.extract_strided_slice %362 {offsets = [0, 220], sizes = [8, 36], strides = [1, 1]} : vector<8x256xf32> to vector<8x36xf32>
    %663 = vector.extract_strided_slice %362 {offsets = [0, 0], sizes = [8, 220], strides = [1, 1]} : vector<8x256xf32> to vector<8x220xf32>
    %664 = tpu.concatenate %662, %663 in 1 : vector<8x36xf32>, vector<8x220xf32> -> vector<8x256xf32>
    %665 = vector.extract_strided_slice %360 {offsets = [0, 36], sizes = [8, 1], strides = [1, 1]} : vector<8x51xf32> to vector<8x1xf32>
    %666 = vector.broadcast %665 : vector<8x1xf32> to vector<8x256xf32>
    %667 = arith.mulf %664, %666 : vector<8x256xf32>
    %668 = vector.extract_strided_slice %667 {offsets = [0, 0], sizes = [8, 128], strides = [1, 1]} : vector<8x256xf32> to vector<8x128xf32>
    %669 = arith.addf %659, %668 : vector<8x128xf32>
    %670 = vector.extract_strided_slice %667 {offsets = [0, 128], sizes = [8, 128], strides = [1, 1]} : vector<8x256xf32> to vector<8x128xf32>
    %671 = arith.addf %661, %670 : vector<8x128xf32>
    %672 = vector.extract_strided_slice %362 {offsets = [0, 219], sizes = [8, 37], strides = [1, 1]} : vector<8x256xf32> to vector<8x37xf32>
    %673 = vector.extract_strided_slice %362 {offsets = [0, 0], sizes = [8, 219], strides = [1, 1]} : vector<8x256xf32> to vector<8x219xf32>
    %674 = tpu.concatenate %672, %673 in 1 : vector<8x37xf32>, vector<8x219xf32> -> vector<8x256xf32>
    %675 = vector.extract_strided_slice %360 {offsets = [0, 37], sizes = [8, 1], strides = [1, 1]} : vector<8x51xf32> to vector<8x1xf32>
    %676 = vector.broadcast %675 : vector<8x1xf32> to vector<8x256xf32>
    %677 = arith.mulf %674, %676 : vector<8x256xf32>
    %678 = vector.extract_strided_slice %677 {offsets = [0, 0], sizes = [8, 128], strides = [1, 1]} : vector<8x256xf32> to vector<8x128xf32>
    %679 = arith.addf %669, %678 : vector<8x128xf32>
    %680 = vector.extract_strided_slice %677 {offsets = [0, 128], sizes = [8, 128], strides = [1, 1]} : vector<8x256xf32> to vector<8x128xf32>
    %681 = arith.addf %671, %680 : vector<8x128xf32>
    %682 = vector.extract_strided_slice %362 {offsets = [0, 218], sizes = [8, 38], strides = [1, 1]} : vector<8x256xf32> to vector<8x38xf32>
    %683 = vector.extract_strided_slice %362 {offsets = [0, 0], sizes = [8, 218], strides = [1, 1]} : vector<8x256xf32> to vector<8x218xf32>
    %684 = tpu.concatenate %682, %683 in 1 : vector<8x38xf32>, vector<8x218xf32> -> vector<8x256xf32>
    %685 = vector.extract_strided_slice %360 {offsets = [0, 38], sizes = [8, 1], strides = [1, 1]} : vector<8x51xf32> to vector<8x1xf32>
    %686 = vector.broadcast %685 : vector<8x1xf32> to vector<8x256xf32>
    %687 = arith.mulf %684, %686 : vector<8x256xf32>
    %688 = vector.extract_strided_slice %687 {offsets = [0, 0], sizes = [8, 128], strides = [1, 1]} : vector<8x256xf32> to vector<8x128xf32>
    %689 = arith.addf %679, %688 : vector<8x128xf32>
    %690 = vector.extract_strided_slice %687 {offsets = [0, 128], sizes = [8, 128], strides = [1, 1]} : vector<8x256xf32> to vector<8x128xf32>
    %691 = arith.addf %681, %690 : vector<8x128xf32>
    %692 = vector.extract_strided_slice %362 {offsets = [0, 217], sizes = [8, 39], strides = [1, 1]} : vector<8x256xf32> to vector<8x39xf32>
    %693 = vector.extract_strided_slice %362 {offsets = [0, 0], sizes = [8, 217], strides = [1, 1]} : vector<8x256xf32> to vector<8x217xf32>
    %694 = tpu.concatenate %692, %693 in 1 : vector<8x39xf32>, vector<8x217xf32> -> vector<8x256xf32>
    %695 = vector.extract_strided_slice %360 {offsets = [0, 39], sizes = [8, 1], strides = [1, 1]} : vector<8x51xf32> to vector<8x1xf32>
    %696 = vector.broadcast %695 : vector<8x1xf32> to vector<8x256xf32>
    %697 = arith.mulf %694, %696 : vector<8x256xf32>
    %698 = vector.extract_strided_slice %697 {offsets = [0, 0], sizes = [8, 128], strides = [1, 1]} : vector<8x256xf32> to vector<8x128xf32>
    %699 = arith.addf %689, %698 : vector<8x128xf32>
    %700 = vector.extract_strided_slice %697 {offsets = [0, 128], sizes = [8, 128], strides = [1, 1]} : vector<8x256xf32> to vector<8x128xf32>
    %701 = arith.addf %691, %700 : vector<8x128xf32>
    %702 = vector.extract_strided_slice %362 {offsets = [0, 216], sizes = [8, 40], strides = [1, 1]} : vector<8x256xf32> to vector<8x40xf32>
    %703 = vector.extract_strided_slice %362 {offsets = [0, 0], sizes = [8, 216], strides = [1, 1]} : vector<8x256xf32> to vector<8x216xf32>
    %704 = tpu.concatenate %702, %703 in 1 : vector<8x40xf32>, vector<8x216xf32> -> vector<8x256xf32>
    %705 = vector.extract_strided_slice %360 {offsets = [0, 40], sizes = [8, 1], strides = [1, 1]} : vector<8x51xf32> to vector<8x1xf32>
    %706 = vector.broadcast %705 : vector<8x1xf32> to vector<8x256xf32>
    %707 = arith.mulf %704, %706 : vector<8x256xf32>
    %708 = vector.extract_strided_slice %707 {offsets = [0, 0], sizes = [8, 128], strides = [1, 1]} : vector<8x256xf32> to vector<8x128xf32>
    %709 = arith.addf %699, %708 : vector<8x128xf32>
    %710 = vector.extract_strided_slice %707 {offsets = [0, 128], sizes = [8, 128], strides = [1, 1]} : vector<8x256xf32> to vector<8x128xf32>
    %711 = arith.addf %701, %710 : vector<8x128xf32>
    %712 = vector.extract_strided_slice %362 {offsets = [0, 215], sizes = [8, 41], strides = [1, 1]} : vector<8x256xf32> to vector<8x41xf32>
    %713 = vector.extract_strided_slice %362 {offsets = [0, 0], sizes = [8, 215], strides = [1, 1]} : vector<8x256xf32> to vector<8x215xf32>
    %714 = tpu.concatenate %712, %713 in 1 : vector<8x41xf32>, vector<8x215xf32> -> vector<8x256xf32>
    %715 = vector.extract_strided_slice %360 {offsets = [0, 41], sizes = [8, 1], strides = [1, 1]} : vector<8x51xf32> to vector<8x1xf32>
    %716 = vector.broadcast %715 : vector<8x1xf32> to vector<8x256xf32>
    %717 = arith.mulf %714, %716 : vector<8x256xf32>
    %718 = vector.extract_strided_slice %717 {offsets = [0, 0], sizes = [8, 128], strides = [1, 1]} : vector<8x256xf32> to vector<8x128xf32>
    %719 = arith.addf %709, %718 : vector<8x128xf32>
    %720 = vector.extract_strided_slice %717 {offsets = [0, 128], sizes = [8, 128], strides = [1, 1]} : vector<8x256xf32> to vector<8x128xf32>
    %721 = arith.addf %711, %720 : vector<8x128xf32>
    %722 = vector.extract_strided_slice %362 {offsets = [0, 214], sizes = [8, 42], strides = [1, 1]} : vector<8x256xf32> to vector<8x42xf32>
    %723 = vector.extract_strided_slice %362 {offsets = [0, 0], sizes = [8, 214], strides = [1, 1]} : vector<8x256xf32> to vector<8x214xf32>
    %724 = tpu.concatenate %722, %723 in 1 : vector<8x42xf32>, vector<8x214xf32> -> vector<8x256xf32>
    %725 = vector.extract_strided_slice %360 {offsets = [0, 42], sizes = [8, 1], strides = [1, 1]} : vector<8x51xf32> to vector<8x1xf32>
    %726 = vector.broadcast %725 : vector<8x1xf32> to vector<8x256xf32>
    %727 = arith.mulf %724, %726 : vector<8x256xf32>
    %728 = vector.extract_strided_slice %727 {offsets = [0, 0], sizes = [8, 128], strides = [1, 1]} : vector<8x256xf32> to vector<8x128xf32>
    %729 = arith.addf %719, %728 : vector<8x128xf32>
    %730 = vector.extract_strided_slice %727 {offsets = [0, 128], sizes = [8, 128], strides = [1, 1]} : vector<8x256xf32> to vector<8x128xf32>
    %731 = arith.addf %721, %730 : vector<8x128xf32>
    %732 = vector.extract_strided_slice %362 {offsets = [0, 213], sizes = [8, 43], strides = [1, 1]} : vector<8x256xf32> to vector<8x43xf32>
    %733 = vector.extract_strided_slice %362 {offsets = [0, 0], sizes = [8, 213], strides = [1, 1]} : vector<8x256xf32> to vector<8x213xf32>
    %734 = tpu.concatenate %732, %733 in 1 : vector<8x43xf32>, vector<8x213xf32> -> vector<8x256xf32>
    %735 = vector.extract_strided_slice %360 {offsets = [0, 43], sizes = [8, 1], strides = [1, 1]} : vector<8x51xf32> to vector<8x1xf32>
    %736 = vector.broadcast %735 : vector<8x1xf32> to vector<8x256xf32>
    %737 = arith.mulf %734, %736 : vector<8x256xf32>
    %738 = vector.extract_strided_slice %737 {offsets = [0, 0], sizes = [8, 128], strides = [1, 1]} : vector<8x256xf32> to vector<8x128xf32>
    %739 = arith.addf %729, %738 : vector<8x128xf32>
    %740 = vector.extract_strided_slice %737 {offsets = [0, 128], sizes = [8, 128], strides = [1, 1]} : vector<8x256xf32> to vector<8x128xf32>
    %741 = arith.addf %731, %740 : vector<8x128xf32>
    %742 = vector.extract_strided_slice %362 {offsets = [0, 212], sizes = [8, 44], strides = [1, 1]} : vector<8x256xf32> to vector<8x44xf32>
    %743 = vector.extract_strided_slice %362 {offsets = [0, 0], sizes = [8, 212], strides = [1, 1]} : vector<8x256xf32> to vector<8x212xf32>
    %744 = tpu.concatenate %742, %743 in 1 : vector<8x44xf32>, vector<8x212xf32> -> vector<8x256xf32>
    %745 = vector.extract_strided_slice %360 {offsets = [0, 44], sizes = [8, 1], strides = [1, 1]} : vector<8x51xf32> to vector<8x1xf32>
    %746 = vector.broadcast %745 : vector<8x1xf32> to vector<8x256xf32>
    %747 = arith.mulf %744, %746 : vector<8x256xf32>
    %748 = vector.extract_strided_slice %747 {offsets = [0, 0], sizes = [8, 128], strides = [1, 1]} : vector<8x256xf32> to vector<8x128xf32>
    %749 = arith.addf %739, %748 : vector<8x128xf32>
    %750 = vector.extract_strided_slice %747 {offsets = [0, 128], sizes = [8, 128], strides = [1, 1]} : vector<8x256xf32> to vector<8x128xf32>
    %751 = arith.addf %741, %750 : vector<8x128xf32>
    %752 = vector.extract_strided_slice %362 {offsets = [0, 211], sizes = [8, 45], strides = [1, 1]} : vector<8x256xf32> to vector<8x45xf32>
    %753 = vector.extract_strided_slice %362 {offsets = [0, 0], sizes = [8, 211], strides = [1, 1]} : vector<8x256xf32> to vector<8x211xf32>
    %754 = tpu.concatenate %752, %753 in 1 : vector<8x45xf32>, vector<8x211xf32> -> vector<8x256xf32>
    %755 = vector.extract_strided_slice %360 {offsets = [0, 45], sizes = [8, 1], strides = [1, 1]} : vector<8x51xf32> to vector<8x1xf32>
    %756 = vector.broadcast %755 : vector<8x1xf32> to vector<8x256xf32>
    %757 = arith.mulf %754, %756 : vector<8x256xf32>
    %758 = vector.extract_strided_slice %757 {offsets = [0, 0], sizes = [8, 128], strides = [1, 1]} : vector<8x256xf32> to vector<8x128xf32>
    %759 = arith.addf %749, %758 : vector<8x128xf32>
    %760 = vector.extract_strided_slice %757 {offsets = [0, 128], sizes = [8, 128], strides = [1, 1]} : vector<8x256xf32> to vector<8x128xf32>
    %761 = arith.addf %751, %760 : vector<8x128xf32>
    %762 = vector.extract_strided_slice %362 {offsets = [0, 210], sizes = [8, 46], strides = [1, 1]} : vector<8x256xf32> to vector<8x46xf32>
    %763 = vector.extract_strided_slice %362 {offsets = [0, 0], sizes = [8, 210], strides = [1, 1]} : vector<8x256xf32> to vector<8x210xf32>
    %764 = tpu.concatenate %762, %763 in 1 : vector<8x46xf32>, vector<8x210xf32> -> vector<8x256xf32>
    %765 = vector.extract_strided_slice %360 {offsets = [0, 46], sizes = [8, 1], strides = [1, 1]} : vector<8x51xf32> to vector<8x1xf32>
    %766 = vector.broadcast %765 : vector<8x1xf32> to vector<8x256xf32>
    %767 = arith.mulf %764, %766 : vector<8x256xf32>
    %768 = vector.extract_strided_slice %767 {offsets = [0, 0], sizes = [8, 128], strides = [1, 1]} : vector<8x256xf32> to vector<8x128xf32>
    %769 = arith.addf %759, %768 : vector<8x128xf32>
    %770 = vector.extract_strided_slice %767 {offsets = [0, 128], sizes = [8, 128], strides = [1, 1]} : vector<8x256xf32> to vector<8x128xf32>
    %771 = arith.addf %761, %770 : vector<8x128xf32>
    %772 = vector.extract_strided_slice %362 {offsets = [0, 209], sizes = [8, 47], strides = [1, 1]} : vector<8x256xf32> to vector<8x47xf32>
    %773 = vector.extract_strided_slice %362 {offsets = [0, 0], sizes = [8, 209], strides = [1, 1]} : vector<8x256xf32> to vector<8x209xf32>
    %774 = tpu.concatenate %772, %773 in 1 : vector<8x47xf32>, vector<8x209xf32> -> vector<8x256xf32>
    %775 = vector.extract_strided_slice %360 {offsets = [0, 47], sizes = [8, 1], strides = [1, 1]} : vector<8x51xf32> to vector<8x1xf32>
    %776 = vector.broadcast %775 : vector<8x1xf32> to vector<8x256xf32>
    %777 = arith.mulf %774, %776 : vector<8x256xf32>
    %778 = vector.extract_strided_slice %777 {offsets = [0, 0], sizes = [8, 128], strides = [1, 1]} : vector<8x256xf32> to vector<8x128xf32>
    %779 = arith.addf %769, %778 : vector<8x128xf32>
    %780 = vector.extract_strided_slice %777 {offsets = [0, 128], sizes = [8, 128], strides = [1, 1]} : vector<8x256xf32> to vector<8x128xf32>
    %781 = arith.addf %771, %780 : vector<8x128xf32>
    %782 = vector.extract_strided_slice %362 {offsets = [0, 208], sizes = [8, 48], strides = [1, 1]} : vector<8x256xf32> to vector<8x48xf32>
    %783 = vector.extract_strided_slice %362 {offsets = [0, 0], sizes = [8, 208], strides = [1, 1]} : vector<8x256xf32> to vector<8x208xf32>
    %784 = tpu.concatenate %782, %783 in 1 : vector<8x48xf32>, vector<8x208xf32> -> vector<8x256xf32>
    %785 = vector.extract_strided_slice %360 {offsets = [0, 48], sizes = [8, 1], strides = [1, 1]} : vector<8x51xf32> to vector<8x1xf32>
    %786 = vector.broadcast %785 : vector<8x1xf32> to vector<8x256xf32>
    %787 = arith.mulf %784, %786 : vector<8x256xf32>
    %788 = vector.extract_strided_slice %787 {offsets = [0, 0], sizes = [8, 128], strides = [1, 1]} : vector<8x256xf32> to vector<8x128xf32>
    %789 = arith.addf %779, %788 : vector<8x128xf32>
    %790 = vector.extract_strided_slice %787 {offsets = [0, 128], sizes = [8, 128], strides = [1, 1]} : vector<8x256xf32> to vector<8x128xf32>
    %791 = arith.addf %781, %790 : vector<8x128xf32>
    %792 = vector.extract_strided_slice %362 {offsets = [0, 207], sizes = [8, 49], strides = [1, 1]} : vector<8x256xf32> to vector<8x49xf32>
    %793 = vector.extract_strided_slice %362 {offsets = [0, 0], sizes = [8, 207], strides = [1, 1]} : vector<8x256xf32> to vector<8x207xf32>
    %794 = tpu.concatenate %792, %793 in 1 : vector<8x49xf32>, vector<8x207xf32> -> vector<8x256xf32>
    %795 = vector.extract_strided_slice %360 {offsets = [0, 49], sizes = [8, 1], strides = [1, 1]} : vector<8x51xf32> to vector<8x1xf32>
    %796 = vector.broadcast %795 : vector<8x1xf32> to vector<8x256xf32>
    %797 = arith.mulf %794, %796 : vector<8x256xf32>
    %798 = vector.extract_strided_slice %797 {offsets = [0, 0], sizes = [8, 128], strides = [1, 1]} : vector<8x256xf32> to vector<8x128xf32>
    %799 = arith.addf %789, %798 : vector<8x128xf32>
    %800 = vector.extract_strided_slice %797 {offsets = [0, 128], sizes = [8, 128], strides = [1, 1]} : vector<8x256xf32> to vector<8x128xf32>
    %801 = arith.addf %791, %800 : vector<8x128xf32>
    %802 = vector.extract_strided_slice %362 {offsets = [0, 206], sizes = [8, 50], strides = [1, 1]} : vector<8x256xf32> to vector<8x50xf32>
    %803 = vector.extract_strided_slice %362 {offsets = [0, 0], sizes = [8, 206], strides = [1, 1]} : vector<8x256xf32> to vector<8x206xf32>
    %804 = tpu.concatenate %802, %803 in 1 : vector<8x50xf32>, vector<8x206xf32> -> vector<8x256xf32>
    %805 = vector.extract_strided_slice %360 {offsets = [0, 50], sizes = [8, 1], strides = [1, 1]} : vector<8x51xf32> to vector<8x1xf32>
    %806 = vector.broadcast %805 : vector<8x1xf32> to vector<8x256xf32>
    %807 = arith.mulf %804, %806 : vector<8x256xf32>
    %808 = vector.extract_strided_slice %807 {offsets = [0, 0], sizes = [8, 128], strides = [1, 1]} : vector<8x256xf32> to vector<8x128xf32>
    %809 = arith.addf %799, %808 : vector<8x128xf32>
    %810 = vector.extract_strided_slice %807 {offsets = [0, 128], sizes = [8, 128], strides = [1, 1]} : vector<8x256xf32> to vector<8x128xf32>
    %811 = arith.addf %801, %810 : vector<8x128xf32>
    %812 = tpu.concatenate %809, %811 in 1 : vector<8x128xf32>, vector<8x128xf32> -> vector<8x256xf32>
    %c0_7 = arith.constant 0 : index
    %c0_8 = arith.constant 0 : index
    %813 = vector.load %arg2[%c0_7, %c0_8] : memref<256x51xf32, #tpu.memory_space<vmem>>, vector<256x51xf32>
    %cst_9 = arith.constant dense<0.000000e+00> : vector<8x51xf32>
    %814 = tpu.matmul %812, %813, %cst_9 {dimension_numbers = #tpu.dot_dimension_numbers<[1], [0], [0], [1], [0, 0, 1, 1], [], []>} : vector<8x256xf32>, vector<256x51xf32>, vector<8x51xf32> -> vector<8x51xf32>
    %c0_10 = arith.constant 0 : index
    %c0_11 = arith.constant 0 : index
    %815 = vector.load %arg3[%c0_10, %c0_11] : memref<8x51xf32, #tpu.memory_space<vmem>>, vector<8x51xf32>
    tpu.vector_store %arg3[%c0_10, %c0_11], %814 {strides = array<i32>} : memref<8x51xf32, #tpu.memory_space<vmem>>, vector<8x51xf32>,
    return
  }
  func.func @transform_0(%arg0: i32) -> (i32, i32, i32) {
    %c0_i32 = arith.constant 0 : i32
    %c0_i32_0 = arith.constant 0 : i32
    %c0_i32_1 = arith.constant 0 : i32
    return %c0_i32, %arg0, %c0_i32_0 : i32, i32, i32
  }
  func.func @transform_1(%arg0: i32) -> (i32, i32) {
    %c0_i32 = arith.constant 0 : i32
    %c0_i32_0 = arith.constant 0 : i32
    %c0_i32_1 = arith.constant 0 : i32
    return %c0_i32, %c0_i32_0 : i32, i32
  }
  func.func @transform_2(%arg0: i32) -> (i32, i32) {
    %c0_i32 = arith.constant 0 : i32
    %c0_i32_0 = arith.constant 0 : i32
    return %arg0, %c0_i32 : i32, i32
  }
}

</mosaic_0001>

<llo_original>
// kernel: tpu_custom_call.1
$region0: #{tpu_custom_call.1}
  #allocation0 [shape = 'u32[]', space=smem, size = 0x4, offset = 0x4, fixed_abs, tag = 'smem constant byte address 0x4 - core index']
  #allocation1 [shape = 'u32[144,128]{1,0:T(1,128)}', space=vmem, size = 0x12000, scoped, tag = 'internal scratch']
  %s0 = inlined_call_operand.vmem [shape: f32[3,16,51], index: 0, kind: input, shape index: {}]
  %s1 = inlined_call_operand.vmem [shape: f32[256,51], index: 1, kind: input, shape index: {}]
  %s2 = inlined_call_operand.hbm [shape: f32[16,51], index: 2, kind: output, shape index: {}]
  %s3 = sld [smem:[#allocation0]]
  $region79: #{tpu_custom_call.1} parent=0
    _
  %s5 = ssub.s32 1, %s3
  %s6 = scalar_select 0, %s5, %s3
  $region1: #{tpu_custom_call.1} parent=0
    #allocation2 [shape = 'u8[24576]{0}', space=vmem, size = 0x6000, scoped, tag = 'input window, operand 0']
    #allocation3 [shape = 'u8[8192]{0}', space=vmem, size = 0x2000, scoped, tag = 'output window, operand 0']
    #allocation4 [shape = 's32[2]{0}', space=sflag, size = 0x8, scoped, tag = 'scoped memory for tpu_custom_call.1']
    %7 = vsyncpa [#allocation4], 0
    %s8 = scalar_lea.sflag [#allocation4], 1
    %9 = vsyncpa %s8, 0
    loop: start=0, step=1, limit=4
    $region2: #{tpu_custom_call.1} parent=1 // loop_pre_header
      _
    $region3: #{tpu_custom_call.1} parent=1 // loop_header
      %s11 = sphi 0, %s15
      %p12 = scmp.ge.s32.totalorder %s11, 4
      %s21 = sphi 0, %s23
      %s24 = sphi 0, %s21
      %s25 = sphi 0, %s24
      %s41 = sphi 0, %s25
      %s45 = sphi 0, %s45
      %s47 = sphi 0, %s45
      %s48 = sphi 0, %s47
      %s62 = sphi 0, %s48
      %s68 = sphi 0, %s70
      %s71 = sphi 0, %s68
      %s72 = sphi 0, %s71
      %s88 = sphi 0, %s72
    $region4: #{tpu_custom_call.1} parent=1 // loop_header_branch
      %14 = sbr.rel (%p12) target = $region8
    $region5: #{tpu_custom_call.1} parent=1 // loop_body
      %s16 = ssub.s32 %s11, 1
      %s17 = ssub.s32 %s11, 2
      %s18 = sadd.s32 %s11, 1
      %s19 = ssub.s32 %s11, %s18
      %p20 = scmp.eq.s32.totalorder %s19, 0
      %s22 = sadd.s32 %s21, 1
      %s23 = scalar_select %p20, %s21, %s22
      %p26 = pneg %p20
      %p27 = scmp.eq.s32.totalorder %s11, 1
      %p28 = por %p26, %p27
      %p29 = scmp.ne.s32.totalorder %s21, %s24
      %p30 = scmp.eq.s32.totalorder %s11, 0
      %p31 = por %p29, %p30
      %p32 = scmp.ne.s32.totalorder %s21, %s24
      %p33 = scmp.eq.s32.totalorder %s16, 1
      %p34 = por %p32, %p33
      %p35 = scmp.ne.s32.totalorder %s24, %s25
      %p36 = scmp.eq.s32.totalorder %s16, 0
      %p37 = por %p35, %p36
      %p38 = scmp.ne.s32.totalorder %s24, %s25
      %p39 = scmp.eq.s32.totalorder %s17, 1
      %p40 = por %p38, %p39
      %p42 = scmp.ne.s32.totalorder %s25, %s41
      %p43 = scmp.eq.s32.totalorder %s17, 0
      %p44 = por %p42, %p43
      %s46 = sadd.s32 %s45, 1
      %p49 = scmp.eq.s32.totalorder %s11, 1
      %p50 = scmp.ne.s32.totalorder %s45, %s47
      %p51 = scmp.eq.s32.totalorder %s11, 0
      %p52 = por %p50, %p51
      %p53 = scmp.ne.s32.totalorder %s45, %s47
      %p54 = scmp.eq.s32.totalorder %s16, 1
      %p55 = por %p53, %p54
      %p56 = scmp.ne.s32.totalorder %s47, %s48
      %p57 = scmp.eq.s32.totalorder %s16, 0
      %p58 = por %p56, %p57
      %p59 = scmp.ne.s32.totalorder %s47, %s48
      %p60 = scmp.eq.s32.totalorder %s17, 1
      %p61 = por %p59, %p60
      %p63 = scmp.ne.s32.totalorder %s48, %s62
      %p64 = scmp.eq.s32.totalorder %s17, 0
      %p65 = por %p63, %p64
      %s66 = ssub.s32 %s11, %s18
      %p67 = scmp.eq.s32.totalorder %s66, 0
      %s69 = sadd.s32 %s68, 1
      %s70 = scalar_select %p67, %s68, %s69
      %p73 = pneg %p67
      %p74 = scmp.eq.s32.totalorder %s11, 1
      %p75 = por %p73, %p74
      %p76 = scmp.ne.s32.totalorder %s68, %s71
      %p77 = scmp.eq.s32.totalorder %s11, 0
      %p78 = por %p76, %p77
      %p79 = scmp.ne.s32.totalorder %s68, %s71
      %p80 = scmp.eq.s32.totalorder %s16, 1
      %p81 = por %p79, %p80
      %p82 = scmp.ne.s32.totalorder %s71, %s72
      %p83 = scmp.eq.s32.totalorder %s16, 0
      %p84 = por %p82, %p83
      %p85 = scmp.ne.s32.totalorder %s71, %s72
      %p86 = scmp.eq.s32.totalorder %s17, 1
      %p87 = por %p85, %p86
      %p89 = scmp.ne.s32.totalorder %s72, %s88
      %p90 = scmp.eq.s32.totalorder %s17, 0
      %p91 = por %p89, %p90
      %p92 = scmp.le.s32.totalorder 1, %s11
      %p93 = scmp.lt.s32.totalorder %s11, 3
      %p94 = pnand %p92, %p93
      %p95 = pneg %p94
      // Predicated region
      $region9: #{tpu_custom_call.1} parent=5 // pred_check
        _
      $region10: #{tpu_custom_call.1} parent=5 // pred_check_branch
        %97 = sbr.rel (%p94) target = $region12
      $region11: #{tpu_custom_call.1} parent=5 // pred_region
        %s98 = ssub.s32 %s11, 1
        // Predicated region
        $region13: #{tpu_custom_call.1} parent=11 // pred_check
          %p99 = pneg %p58
        $region14: #{tpu_custom_call.1} parent=11 // pred_check_branch
          %101 = sbr.rel (%p99) target = $region16
        $region15: #{tpu_custom_call.1} parent=11 // pred_region
          _
        $region16: #{tpu_custom_call.1} parent=11 // pred_fallthru
          _
      $region12: #{tpu_custom_call.1} parent=5 // pred_fallthru
        _
      %p102 = scmp.lt.s32.totalorder %s11, 2
      // Predicated region
      $region17: #{tpu_custom_call.1} parent=5 // pred_check
        %p103 = pneg %p102
      $region18: #{tpu_custom_call.1} parent=5 // pred_check_branch
        %105 = sbr.rel (%p103) target = $region20
      $region19: #{tpu_custom_call.1} parent=5 // pred_region
        // Predicated region
        $region21: #{tpu_custom_call.1} parent=19 // pred_check
          %p106 = pneg %p31
        $region22: #{tpu_custom_call.1} parent=19 // pred_check_branch
          %108 = sbr.rel (%p106) target = $region24
        $region23: #{tpu_custom_call.1} parent=19 // pred_region
          %s109 = sand.u32 %s21, 1
          %s110 = sand.u32 %s21, 1
          %s111 = smul.addr %s110, 24
          %s112 = scalar_lea.vmem [#allocation2], %s111
          %s113 = smul.addr %s11, 8
          %s114 = scalar_lea.vmem %s0, %s113
          // Predicated region
          $region25: #{tpu_custom_call.1} parent=23 // pred_check
            _
          $region26: #{tpu_custom_call.1} parent=23 // pred_check_branch
            %116 = sbr.rel (0) target = $region28
          $region27: #{tpu_custom_call.1} parent=23 // pred_region
            // Predicated region
            $region29: #{tpu_custom_call.1} parent=27 // pred_check
              _
            $region30: #{tpu_custom_call.1} parent=27 // pred_check_branch
              %118 = sbr.rel (0) target = $region32
            $region31: #{tpu_custom_call.1} parent=27 // pred_region
              // Predicated region
              $region44: #{tpu_custom_call.1} parent=31 // pred_check
                _
              $region45: #{tpu_custom_call.1} parent=31 // pred_check_branch
                %138 = sbr.rel (0) target = $region47
              $region46: #{tpu_custom_call.1} parent=31 // pred_region
                loop: start=0, step=1, limit=1
                $region48: #{tpu_custom_call.1} parent=46 // loop_pre_header
                  _
                $region49: #{tpu_custom_call.1} parent=46 // loop_header
                  %s140 = sphi 0, %s144
                  %p141 = scmp.ge.s32.totalorder %s140, 1
                  %s145 = sphi %s114, %s114
                  %s146 = sphi %s112, %s112
                $region50: #{tpu_custom_call.1} parent=46 // loop_header_branch
                  %143 = sbr.rel (%p141) target = $region54
                $region51: #{tpu_custom_call.1} parent=46 // loop_body
                  %v147 = vld [vmem:[%s145] sm:$0xff]
                  %148 = vst [vmem:[%s146] sm:$0xff] %v147
                  %v149 = vld [vmem:[%s145 + $0x10] sm:$0xff]
                  %150 = vst [vmem:[%s146 + $0x8] sm:$0xff] %v149
                  %v151 = vld [vmem:[%s145 + $0x20] sm:$0xff]
                  %152 = vst [vmem:[%s146 + $0x10] sm:$0xff] %v151
                $region52: #{tpu_custom_call.1} parent=46 // loop_footer
                  %s144 = sadd.s32 1, %s140
                $region53: #{tpu_custom_call.1} parent=46 // loop_footer_branch
                  %139 = sbr.rel target = $region49
                $region54: #{tpu_custom_call.1} parent=46 // loop_exit
                  _
              $region47: #{tpu_custom_call.1} parent=31 // pred_fallthru
                _
              // Predicated region
              $region55: #{tpu_custom_call.1} parent=31 // pred_check
                _
              $region56: #{tpu_custom_call.1} parent=31 // pred_check_branch
                %154 = sbr.rel target = $region58
              $region57: #{tpu_custom_call.1} parent=31 // pred_region
                _
              $region58: #{tpu_custom_call.1} parent=31 // pred_fallthru
                _
            $region32: #{tpu_custom_call.1} parent=27 // pred_fallthru
              _
            // Predicated region
            $region33: #{tpu_custom_call.1} parent=27 // pred_check
              _
            $region34: #{tpu_custom_call.1} parent=27 // pred_check_branch
              %120 = sbr.rel target = $region36
            $region35: #{tpu_custom_call.1} parent=27 // pred_region
              %s122 = ssub.s32 256, 1
              loop: start=0, step=1, limit=1
              $region37: #{tpu_custom_call.1} parent=35 // loop_pre_header
                _
              $region38: #{tpu_custom_call.1} parent=35 // loop_header
                %s124 = sphi 0, %s128
                %p125 = scmp.ge.s32.totalorder %s124, 1
                %s129 = sphi %s114, %s114
                %s130 = sphi %s112, %s112
              $region39: #{tpu_custom_call.1} parent=35 // loop_header_branch
                %127 = sbr.rel (%p125) target = $region43
              $region40: #{tpu_custom_call.1} parent=35 // loop_body
                %v131 = vld [vmem:[%s129] sm:%s122]
                %132 = vst [vmem:[%s130] sm:%s122] %v131
                %v133 = vld [vmem:[%s129 + $0x10] sm:%s122]
                %134 = vst [vmem:[%s130 + $0x8] sm:%s122] %v133
                %v135 = vld [vmem:[%s129 + $0x20] sm:%s122]
                %136 = vst [vmem:[%s130 + $0x10] sm:%s122] %v135
              $region41: #{tpu_custom_call.1} parent=35 // loop_footer
                %s128 = sadd.s32 1, %s124
              $region42: #{tpu_custom_call.1} parent=35 // loop_footer_branch
                %123 = sbr.rel target = $region38
              $region43: #{tpu_custom_call.1} parent=35 // loop_exit
                _
            $region36: #{tpu_custom_call.1} parent=27 // pred_fallthru
              _
          $region28: #{tpu_custom_call.1} parent=23 // pred_fallthru
            _
          %155 = vnop
        $region24: #{tpu_custom_call.1} parent=19 // pred_fallthru
          _
      $region20: #{tpu_custom_call.1} parent=5 // pred_fallthru
        _
      %p156 = scmp.le.s32.totalorder 1, %s11
      %p157 = scmp.lt.s32.totalorder %s11, 3
      %p158 = pnand %p156, %p157
      %p159 = pneg %p158
      // Predicated region
      $region59: #{tpu_custom_call.1} parent=5 // pred_check
        _
      $region60: #{tpu_custom_call.1} parent=5 // pred_check_branch
        %161 = sbr.rel (%p158) target = $region62
      $region61: #{tpu_custom_call.1} parent=5 // pred_region
        %s162 = ssub.s32 %s11, 1
        %s163 = sand.u32 %s24, 1
        %s164 = sand.u32 %s24, 1
        %s165 = smul.addr %s164, 24
        %s166 = scalar_lea.vmem [#allocation2], %s165
        // Predicated region
        $region63: #{tpu_custom_call.1} parent=61 // pred_check
          %p167 = pneg %p37
        $region64: #{tpu_custom_call.1} parent=61 // pred_check_branch
          %169 = sbr.rel (%p167) target = $region66
        $region65: #{tpu_custom_call.1} parent=61 // pred_region
          _
        $region66: #{tpu_custom_call.1} parent=61 // pred_fallthru
          _
        %s170 = sand.u32 %s24, 1
        %s171 = sand.u32 %s24, 1
        %s172 = smul.addr %s171, 24
        %s173 = scalar_lea.vmem [#allocation2], %s172
        %p174 = pneg %p37
        %p175 = pneg %p34
        %p176 = pneg %p58
        %p177 = pneg %p55
        %p178 = pneg %p84
        %p179 = pneg %p81
        %s180 = sand.u32 %s71, 1
        %s181 = scalar_lea.sflag [#allocation4], %s180
        %s182 = sand.u32 %s71, 1
        %s183 = smul.addr %s182, 8
        %s184 = scalar_lea.vmem [#allocation3], %s183
        %v185 = vld [vmem:[%s166] sm:$0xff]
        %s186 = scalar_lea.vmem %s166, 8 [#allocation2]
        %v187 = vld [vmem:[%s186] sm:$0xff]
        %vm188 = vcmask 416768
        %v189 = vsel %vm188, %v185, 0.0
        %191 = vset.pattern.permute.xlu0 0
        %192 = vperm.xlu0 %191, %v187
        %v193 = vpop.permute.xlu0 %192
        %v195 = vmul.f32 %v189, %v193
        %197 = vrot.lane.b32.xlu0 %v189, 1
        %v198 = vpop.permute.xlu0 %197
        %200 = vset.pattern.permute.xlu0 1
        %201 = vperm.xlu0 %200, %v187
        %v202 = vpop.permute.xlu0 %201
        %v204 = vmul.f32 %v198, %v202
        %v205 = vadd.f32 %v195, %v204
        %206 = vrot.lane.b32.xlu0 %v189, 2
        %v207 = vpop.permute.xlu0 %206
        %209 = vset.pattern.permute.xlu0 2
        %210 = vperm.xlu0 %209, %v187
        %v211 = vpop.permute.xlu0 %210
        %v213 = vmul.f32 %v207, %v211
        %v214 = vadd.f32 %v205, %v213
        %215 = vrot.lane.b32.xlu0 %v189, 3
        %v216 = vpop.permute.xlu0 %215
        %218 = vset.pattern.permute.xlu0 3
        %219 = vperm.xlu0 %218, %v187
        %v220 = vpop.permute.xlu0 %219
        %v222 = vmul.f32 %v216, %v220
        %v223 = vadd.f32 %v214, %v222
        %224 = vrot.lane.b32.xlu0 %v189, 4
        %v225 = vpop.permute.xlu0 %224
        %227 = vset.pattern.permute.xlu0 4
        %228 = vperm.xlu0 %227, %v187
        %v229 = vpop.permute.xlu0 %228
        %v231 = vmul.f32 %v225, %v229
        %v232 = vadd.f32 %v223, %v231
        %233 = vrot.lane.b32.xlu0 %v189, 5
        %v234 = vpop.permute.xlu0 %233
        %236 = vset.pattern.permute.xlu0 5
        %237 = vperm.xlu0 %236, %v187
        %v238 = vpop.permute.xlu0 %237
        %v240 = vmul.f32 %v234, %v238
        %v241 = vadd.f32 %v232, %v240
        %242 = vrot.lane.b32.xlu0 %v189, 6
        %v243 = vpop.permute.xlu0 %242
        %245 = vset.pattern.permute.xlu0 6
        %246 = vperm.xlu0 %245, %v187
        %v247 = vpop.permute.xlu0 %246
        %v249 = vmul.f32 %v243, %v247
        %v250 = vadd.f32 %v241, %v249
        %251 = vrot.lane.b32.xlu0 %v189, 7
        %v252 = vpop.permute.xlu0 %251
        %254 = vset.pattern.permute.xlu0 7
        %255 = vperm.xlu0 %254, %v187
        %v256 = vpop.permute.xlu0 %255
        %v258 = vmul.f32 %v252, %v256
        %v259 = vadd.f32 %v250, %v258
        %260 = vrot.lane.b32.xlu0 %v189, 8
        %v261 = vpop.permute.xlu0 %260
        %263 = vset.pattern.permute.xlu0 8
        %264 = vperm.xlu0 %263, %v187
        %v265 = vpop.permute.xlu0 %264
        %v267 = vmul.f32 %v261, %v265
        %v268 = vadd.f32 %v259, %v267
        %269 = vrot.lane.b32.xlu0 %v189, 9
        %v270 = vpop.permute.xlu0 %269
        %272 = vset.pattern.permute.xlu0 9
        %273 = vperm.xlu0 %272, %v187
        %v274 = vpop.permute.xlu0 %273
        %v276 = vmul.f32 %v270, %v274
        %v277 = vadd.f32 %v268, %v276
        %278 = vrot.lane.b32.xlu0 %v189, 10
        %v279 = vpop.permute.xlu0 %278
        %281 = vset.pattern.permute.xlu0 10
        %282 = vperm.xlu0 %281, %v187
        %v283 = vpop.permute.xlu0 %282
        %v285 = vmul.f32 %v279, %v283
        %v286 = vadd.f32 %v277, %v285
        %287 = vrot.lane.b32.xlu0 %v189, 11
        %v288 = vpop.permute.xlu0 %287
        %290 = vset.pattern.permute.xlu0 11
        %291 = vperm.xlu0 %290, %v187
        %v292 = vpop.permute.xlu0 %291
        %v294 = vmul.f32 %v288, %v292
        %v295 = vadd.f32 %v286, %v294
        %296 = vrot.lane.b32.xlu0 %v189, 12
        %v297 = vpop.permute.xlu0 %296
        %299 = vset.pattern.permute.xlu0 12
        %300 = vperm.xlu0 %299, %v187
        %v301 = vpop.permute.xlu0 %300
        %v303 = vmul.f32 %v297, %v301
        %v304 = vadd.f32 %v295, %v303
        %305 = vrot.lane.b32.xlu0 %v189, 13
        %v306 = vpop.permute.xlu0 %305
        %308 = vset.pattern.permute.xlu0 13
        %309 = vperm.xlu0 %308, %v187
        %v310 = vpop.permute.xlu0 %309
        %v312 = vmul.f32 %v306, %v310
        %v313 = vadd.f32 %v304, %v312
        %314 = vrot.lane.b32.xlu0 %v189, 14
        %v315 = vpop.permute.xlu0 %314
        %317 = vset.pattern.permute.xlu0 14
        %318 = vperm.xlu0 %317, %v187
        %v319 = vpop.permute.xlu0 %318
        %v321 = vmul.f32 %v315, %v319
        %v322 = vadd.f32 %v313, %v321
        %323 = vrot.lane.b32.xlu0 %v189, 15
        %v324 = vpop.permute.xlu0 %323
        %326 = vset.pattern.permute.xlu0 15
        %327 = vperm.xlu0 %326, %v187
        %v328 = vpop.permute.xlu0 %327
        %v330 = vmul.f32 %v324, %v328
        %v331 = vadd.f32 %v322, %v330
        %332 = vrot.lane.b32.xlu0 %v189, 16
        %v333 = vpop.permute.xlu0 %332
        %335 = vset.pattern.permute.xlu0 16
        %336 = vperm.xlu0 %335, %v187
        %v337 = vpop.permute.xlu0 %336
        %v339 = vmul.f32 %v333, %v337
        %v340 = vadd.f32 %v331, %v339
        %341 = vrot.lane.b32.xlu0 %v189, 17
        %v342 = vpop.permute.xlu0 %341
        %344 = vset.pattern.permute.xlu0 17
        %345 = vperm.xlu0 %344, %v187
        %v346 = vpop.permute.xlu0 %345
        %v348 = vmul.f32 %v342, %v346
        %v349 = vadd.f32 %v340, %v348
        %350 = vrot.lane.b32.xlu0 %v189, 18
        %v351 = vpop.permute.xlu0 %350
        %353 = vset.pattern.permute.xlu0 18
        %354 = vperm.xlu0 %353, %v187
        %v355 = vpop.permute.xlu0 %354
        %v357 = vmul.f32 %v351, %v355
        %v358 = vadd.f32 %v349, %v357
        %359 = vrot.lane.b32.xlu0 %v189, 19
        %v360 = vpop.permute.xlu0 %359
        %362 = vset.pattern.permute.xlu0 19
        %363 = vperm.xlu0 %362, %v187
        %v364 = vpop.permute.xlu0 %363
        %v366 = vmul.f32 %v360, %v364
        %v367 = vadd.f32 %v358, %v366
        %368 = vrot.lane.b32.xlu0 %v189, 20
        %v369 = vpop.permute.xlu0 %368
        %371 = vset.pattern.permute.xlu0 20
        %372 = vperm.xlu0 %371, %v187
        %v373 = vpop.permute.xlu0 %372
        %v375 = vmul.f32 %v369, %v373
        %v376 = vadd.f32 %v367, %v375
        %377 = vrot.lane.b32.xlu0 %v189, 21
        %v378 = vpop.permute.xlu0 %377
        %380 = vset.pattern.permute.xlu0 21
        %381 = vperm.xlu0 %380, %v187
        %v382 = vpop.permute.xlu0 %381
        %v384 = vmul.f32 %v378, %v382
        %v385 = vadd.f32 %v376, %v384
        %386 = vrot.lane.b32.xlu0 %v189, 22
        %v387 = vpop.permute.xlu0 %386
        %389 = vset.pattern.permute.xlu0 22
        %390 = vperm.xlu0 %389, %v187
        %v391 = vpop.permute.xlu0 %390
        %v393 = vmul.f32 %v387, %v391
        %v394 = vadd.f32 %v385, %v393
        %395 = vrot.lane.b32.xlu0 %v189, 23
        %v396 = vpop.permute.xlu0 %395
        %398 = vset.pattern.permute.xlu0 23
        %399 = vperm.xlu0 %398, %v187
        %v400 = vpop.permute.xlu0 %399
        %v402 = vmul.f32 %v396, %v400
        %v403 = vadd.f32 %v394, %v402
        %404 = vrot.lane.b32.xlu0 %v189, 24
        %v405 = vpop.permute.xlu0 %404
        %407 = vset.pattern.permute.xlu0 24
        %408 = vperm.xlu0 %407, %v187
        %v409 = vpop.permute.xlu0 %408
        %v411 = vmul.f32 %v405, %v409
        %v412 = vadd.f32 %v403, %v411
        %413 = vrot.lane.b32.xlu0 %v189, 25
        %v414 = vpop.permute.xlu0 %413
        %416 = vset.pattern.permute.xlu0 25
        %417 = vperm.xlu0 %416, %v187
        %v418 = vpop.permute.xlu0 %417
        %v420 = vmul.f32 %v414, %v418
        %v421 = vadd.f32 %v412, %v420
        %422 = vrot.lane.b32.xlu0 %v189, 26
        %v423 = vpop.permute.xlu0 %422
        %425 = vset.pattern.permute.xlu0 26
        %426 = vperm.xlu0 %425, %v187
        %v427 = vpop.permute.xlu0 %426
        %v429 = vmul.f32 %v423, %v427
        %v430 = vadd.f32 %v421, %v429
        %431 = vrot.lane.b32.xlu0 %v189, 27
        %v432 = vpop.permute.xlu0 %431
        %434 = vset.pattern.permute.xlu0 27
        %435 = vperm.xlu0 %434, %v187
        %v436 = vpop.permute.xlu0 %435
        %v438 = vmul.f32 %v432, %v436
        %v439 = vadd.f32 %v430, %v438
        %440 = vrot.lane.b32.xlu0 %v189, 28
        %v441 = vpop.permute.xlu0 %440
        %vm443 = vcmask 228352
        %444 = vset.pattern.permute.xlu0 28
        %445 = vperm.xlu0 %444, %v187
        %v446 = vpop.permute.xlu0 %445
        %v448 = vmul.f32 %v441, %v446
        %v449 = vadd.f32 %v439, %v448
        %450 = vrot.lane.b32.xlu0 %v189, 29
        %v451 = vpop.permute.xlu0 %450
        %vm453 = vcmask 236544
        %454 = vset.pattern.permute.xlu0 29
        %455 = vperm.xlu0 %454, %v187
        %v456 = vpop.permute.xlu0 %455
        %v458 = vmul.f32 %v451, %v456
        %v459 = vadd.f32 %v449, %v458
        %460 = vrot.lane.b32.xlu0 %v189, 30
        %v461 = vpop.permute.xlu0 %460
        %vm463 = vcmask 244736
        %464 = vset.pattern.permute.xlu0 30
        %465 = vperm.xlu0 %464, %v187
        %v466 = vpop.permute.xlu0 %465
        %v468 = vmul.f32 %v461, %v466
        %v469 = vadd.f32 %v459, %v468
        %470 = vrot.lane.b32.xlu0 %v189, 31
        %v471 = vpop.permute.xlu0 %470
        %vm473 = vcmask 252928
        %474 = vset.pattern.permute.xlu0 31
        %475 = vperm.xlu0 %474, %v187
        %v476 = vpop.permute.xlu0 %475
        %v478 = vmul.f32 %v471, %v476
        %v479 = vadd.f32 %v469, %v478
        %480 = vrot.lane.b32.xlu0 %v189, 32
        %v481 = vpop.permute.xlu0 %480
        %vm483 = vcmask 261120
        %484 = vset.pattern.permute.xlu0 32
        %485 = vperm.xlu0 %484, %v187
        %v486 = vpop.permute.xlu0 %485
        %v488 = vmul.f32 %v481, %v486
        %v489 = vadd.f32 %v479, %v488
        %490 = vrot.lane.b32.xlu0 %v189, 33
        %v491 = vpop.permute.xlu0 %490
        %vm493 = vcmask 269312
        %494 = vset.pattern.permute.xlu0 33
        %495 = vperm.xlu0 %494, %v187
        %v496 = vpop.permute.xlu0 %495
        %v498 = vmul.f32 %v491, %v496
        %v499 = vadd.f32 %v489, %v498
        %500 = vrot.lane.b32.xlu0 %v189, 34
        %v501 = vpop.permute.xlu0 %500
        %vm503 = vcmask 277504
        %504 = vset.pattern.permute.xlu0 34
        %505 = vperm.xlu0 %504, %v187
        %v506 = vpop.permute.xlu0 %505
        %v508 = vmul.f32 %v501, %v506
        %v509 = vadd.f32 %v499, %v508
        %510 = vrot.lane.b32.xlu0 %v189, 35
        %v511 = vpop.permute.xlu0 %510
        %vm513 = vcmask 285696
        %514 = vset.pattern.permute.xlu0 35
        %515 = vperm.xlu0 %514, %v187
        %v516 = vpop.permute.xlu0 %515
        %v518 = vmul.f32 %v511, %v516
        %v519 = vadd.f32 %v509, %v518
        %520 = vrot.lane.b32.xlu0 %v189, 36
        %v521 = vpop.permute.xlu0 %520
        %vm523 = vcmask 293888
        %524 = vset.pattern.permute.xlu0 36
        %525 = vperm.xlu0 %524, %v187
        %v526 = vpop.permute.xlu0 %525
        %v528 = vmul.f32 %v521, %v526
        %v529 = vadd.f32 %v519, %v528
        %530 = vrot.lane.b32.xlu0 %v189, 37
        %v531 = vpop.permute.xlu0 %530
        %vm533 = vcmask 302080
        %534 = vset.pattern.permute.xlu0 37
        %535 = vperm.xlu0 %534, %v187
        %v536 = vpop.permute.xlu0 %535
        %v538 = vmul.f32 %v531, %v536
        %v539 = vadd.f32 %v529, %v538
        %540 = vrot.lane.b32.xlu0 %v189, 38
        %v541 = vpop.permute.xlu0 %540
        %vm543 = vcmask 310272
        %544 = vset.pattern.permute.xlu0 38
        %545 = vperm.xlu0 %544, %v187
        %v546 = vpop.permute.xlu0 %545
        %v548 = vmul.f32 %v541, %v546
        %v549 = vadd.f32 %v539, %v548
        %550 = vrot.lane.b32.xlu0 %v189, 39
        %v551 = vpop.permute.xlu0 %550
        %vm553 = vcmask 318464
        %554 = vset.pattern.permute.xlu0 39
        %555 = vperm.xlu0 %554, %v187
        %v556 = vpop.permute.xlu0 %555
        %v558 = vmul.f32 %v551, %v556
        %v559 = vadd.f32 %v549, %v558
        %560 = vrot.lane.b32.xlu0 %v189, 40
        %v561 = vpop.permute.xlu0 %560
        %vm563 = vcmask 326656
        %564 = vset.pattern.permute.xlu0 40
        %565 = vperm.xlu0 %564, %v187
        %v566 = vpop.permute.xlu0 %565
        %v568 = vmul.f32 %v561, %v566
        %v569 = vadd.f32 %v559, %v568
        %570 = vrot.lane.b32.xlu0 %v189, 41
        %v571 = vpop.permute.xlu0 %570
        %vm573 = vcmask 334848
        %574 = vset.pattern.permute.xlu0 41
        %575 = vperm.xlu0 %574, %v187
        %v576 = vpop.permute.xlu0 %575
        %v578 = vmul.f32 %v571, %v576
        %v579 = vadd.f32 %v569, %v578
        %580 = vrot.lane.b32.xlu0 %v189, 42
        %v581 = vpop.permute.xlu0 %580
        %vm583 = vcmask 343040
        %584 = vset.pattern.permute.xlu0 42
        %585 = vperm.xlu0 %584, %v187
        %v586 = vpop.permute.xlu0 %585
        %v588 = vmul.f32 %v581, %v586
        %v589 = vadd.f32 %v579, %v588
        %590 = vrot.lane.b32.xlu0 %v189, 43
        %v591 = vpop.permute.xlu0 %590
        %vm593 = vcmask 351232
        %594 = vset.pattern.permute.xlu0 43
        %595 = vperm.xlu0 %594, %v187
        %v596 = vpop.permute.xlu0 %595
        %v598 = vmul.f32 %v591, %v596
        %v599 = vadd.f32 %v589, %v598
        %600 = vrot.lane.b32.xlu0 %v189, 44
        %v601 = vpop.permute.xlu0 %600
        %vm603 = vcmask 359424
        %604 = vset.pattern.permute.xlu0 44
        %605 = vperm.xlu0 %604, %v187
        %v606 = vpop.permute.xlu0 %605
        %v608 = vmul.f32 %v601, %v606
        %v609 = vadd.f32 %v599, %v608
        %610 = vrot.lane.b32.xlu0 %v189, 45
        %v611 = vpop.permute.xlu0 %610
        %vm613 = vcmask 367616
        %614 = vset.pattern.permute.xlu0 45
        %615 = vperm.xlu0 %614, %v187
        %v616 = vpop.permute.xlu0 %615
        %v618 = vmul.f32 %v611, %v616
        %v619 = vadd.f32 %v609, %v618
        %620 = vrot.lane.b32.xlu0 %v189, 46
        %v621 = vpop.permute.xlu0 %620
        %vm623 = vcmask 375808
        %624 = vset.pattern.permute.xlu0 46
        %625 = vperm.xlu0 %624, %v187
        %v626 = vpop.permute.xlu0 %625
        %v628 = vmul.f32 %v621, %v626
        %v629 = vadd.f32 %v619, %v628
        %630 = vrot.lane.b32.xlu0 %v189, 47
        %v631 = vpop.permute.xlu0 %630
        %vm633 = vcmask 384000
        %634 = vset.pattern.permute.xlu0 47
        %635 = vperm.xlu0 %634, %v187
        %v636 = vpop.permute.xlu0 %635
        %v638 = vmul.f32 %v631, %v636
        %v639 = vadd.f32 %v629, %v638
        %640 = vrot.lane.b32.xlu0 %v189, 48
        %v641 = vpop.permute.xlu0 %640
        %vm643 = vcmask 392192
        %644 = vset.pattern.permute.xlu0 48
        %645 = vperm.xlu0 %644, %v187
        %v646 = vpop.permute.xlu0 %645
        %v648 = vmul.f32 %v641, %v646
        %v649 = vadd.f32 %v639, %v648
        %650 = vrot.lane.b32.xlu0 %v189, 49
        %v651 = vpop.permute.xlu0 %650
        %vm653 = vcmask 400384
        %654 = vset.pattern.permute.xlu0 49
        %655 = vperm.xlu0 %654, %v187
        %v656 = vpop.permute.xlu0 %655
        %v658 = vmul.f32 %v651, %v656
        %v659 = vadd.f32 %v649, %v658
        %660 = vrot.lane.b32.xlu0 %v189, 50
        %v661 = vpop.permute.xlu0 %660
        %vm663 = vcmask 408576
        %664 = vset.pattern.permute.xlu0 50
        %665 = vperm.xlu0 %664, %v187
        %v666 = vpop.permute.xlu0 %665
        %v668 = vmul.f32 %v661, %v666
        %v669 = vadd.f32 %v659, %v668
        %s670 = scalar_lea.vmem %s166, 16 [#allocation2]
        %v671 = vld [vmem:[%s670] sm:$0xff]
        %673 = vset.pattern.permute.xlu0 0
        %674 = vperm.xlu0 %673, %v671
        %v675 = vpop.permute.xlu0 %674
        %v677 = vmul.f32 %v669, %v675
        %679 = vrot.lane.b32.xlu0 %v669, 1
        %v680 = vpop.permute.xlu0 %679
        %682 = vset.pattern.permute.xlu0 1
        %683 = vperm.xlu0 %682, %v671
        %v684 = vpop.permute.xlu0 %683
        %v686 = vmul.f32 %v680, %v684
        %v687 = vadd.f32 %v677, %v686
        %688 = vrot.lane.b32.xlu0 %v669, 2
        %v689 = vpop.permute.xlu0 %688
        %691 = vset.pattern.permute.xlu0 2
        %692 = vperm.xlu0 %691, %v671
        %v693 = vpop.permute.xlu0 %692
        %v695 = vmul.f32 %v689, %v693
        %v696 = vadd.f32 %v687, %v695
        %697 = vrot.lane.b32.xlu0 %v669, 3
        %v698 = vpop.permute.xlu0 %697
        %700 = vset.pattern.permute.xlu0 3
        %701 = vperm.xlu0 %700, %v671
        %v702 = vpop.permute.xlu0 %701
        %v704 = vmul.f32 %v698, %v702
        %v705 = vadd.f32 %v696, %v704
        %706 = vrot.lane.b32.xlu0 %v669, 4
        %v707 = vpop.permute.xlu0 %706
        %709 = vset.pattern.permute.xlu0 4
        %710 = vperm.xlu0 %709, %v671
        %v711 = vpop.permute.xlu0 %710
        %v713 = vmul.f32 %v707, %v711
        %v714 = vadd.f32 %v705, %v713
        %715 = vrot.lane.b32.xlu0 %v669, 5
        %v716 = vpop.permute.xlu0 %715
        %718 = vset.pattern.permute.xlu0 5
        %719 = vperm.xlu0 %718, %v671
        %v720 = vpop.permute.xlu0 %719
        %v722 = vmul.f32 %v716, %v720
        %v723 = vadd.f32 %v714, %v722
        %724 = vrot.lane.b32.xlu0 %v669, 6
        %v725 = vpop.permute.xlu0 %724
        %727 = vset.pattern.permute.xlu0 6
        %728 = vperm.xlu0 %727, %v671
        %v729 = vpop.permute.xlu0 %728
        %v731 = vmul.f32 %v725, %v729
        %v732 = vadd.f32 %v723, %v731
        %733 = vrot.lane.b32.xlu0 %v669, 7
        %v734 = vpop.permute.xlu0 %733
        %736 = vset.pattern.permute.xlu0 7
        %737 = vperm.xlu0 %736, %v671
        %v738 = vpop.permute.xlu0 %737
        %v740 = vmul.f32 %v734, %v738
        %v741 = vadd.f32 %v732, %v740
        %742 = vrot.lane.b32.xlu0 %v669, 8
        %v743 = vpop.permute.xlu0 %742
        %745 = vset.pattern.permute.xlu0 8
        %746 = vperm.xlu0 %745, %v671
        %v747 = vpop.permute.xlu0 %746
        %v749 = vmul.f32 %v743, %v747
        %v750 = vadd.f32 %v741, %v749
        %751 = vrot.lane.b32.xlu0 %v669, 9
        %v752 = vpop.permute.xlu0 %751
        %754 = vset.pattern.permute.xlu0 9
        %755 = vperm.xlu0 %754, %v671
        %v756 = vpop.permute.xlu0 %755
        %v758 = vmul.f32 %v752, %v756
        %v759 = vadd.f32 %v750, %v758
        %760 = vrot.lane.b32.xlu0 %v669, 10
        %v761 = vpop.permute.xlu0 %760
        %763 = vset.pattern.permute.xlu0 10
        %764 = vperm.xlu0 %763, %v671
        %v765 = vpop.permute.xlu0 %764
        %v767 = vmul.f32 %v761, %v765
        %v768 = vadd.f32 %v759, %v767
        %769 = vrot.lane.b32.xlu0 %v669, 11
        %v770 = vpop.permute.xlu0 %769
        %772 = vset.pattern.permute.xlu0 11
        %773 = vperm.xlu0 %772, %v671
        %v774 = vpop.permute.xlu0 %773
        %v776 = vmul.f32 %v770, %v774
        %v777 = vadd.f32 %v768, %v776
        %778 = vrot.lane.b32.xlu0 %v669, 12
        %v779 = vpop.permute.xlu0 %778
        %781 = vset.pattern.permute.xlu0 12
        %782 = vperm.xlu0 %781, %v671
        %v783 = vpop.permute.xlu0 %782
        %v785 = vmul.f32 %v779, %v783
        %v786 = vadd.f32 %v777, %v785
        %787 = vrot.lane.b32.xlu0 %v669, 13
        %v788 = vpop.permute.xlu0 %787
        %790 = vset.pattern.permute.xlu0 13
        %791 = vperm.xlu0 %790, %v671
        %v792 = vpop.permute.xlu0 %791
        %v794 = vmul.f32 %v788, %v792
        %v795 = vadd.f32 %v786, %v794
        %796 = vrot.lane.b32.xlu0 %v669, 14
        %v797 = vpop.permute.xlu0 %796
        %799 = vset.pattern.permute.xlu0 14
        %800 = vperm.xlu0 %799, %v671
        %v801 = vpop.permute.xlu0 %800
        %v803 = vmul.f32 %v797, %v801
        %v804 = vadd.f32 %v795, %v803
        %805 = vrot.lane.b32.xlu0 %v669, 15
        %v806 = vpop.permute.xlu0 %805
        %808 = vset.pattern.permute.xlu0 15
        %809 = vperm.xlu0 %808, %v671
        %v810 = vpop.permute.xlu0 %809
        %v812 = vmul.f32 %v806, %v810
        %v813 = vadd.f32 %v804, %v812
        %814 = vrot.lane.b32.xlu0 %v669, 16
        %v815 = vpop.permute.xlu0 %814
        %817 = vset.pattern.permute.xlu0 16
        %818 = vperm.xlu0 %817, %v671
        %v819 = vpop.permute.xlu0 %818
        %v821 = vmul.f32 %v815, %v819
        %v822 = vadd.f32 %v813, %v821
        %823 = vrot.lane.b32.xlu0 %v669, 17
        %v824 = vpop.permute.xlu0 %823
        %826 = vset.pattern.permute.xlu0 17
        %827 = vperm.xlu0 %826, %v671
        %v828 = vpop.permute.xlu0 %827
        %v830 = vmul.f32 %v824, %v828
        %v831 = vadd.f32 %v822, %v830
        %832 = vrot.lane.b32.xlu0 %v669, 18
        %v833 = vpop.permute.xlu0 %832
        %835 = vset.pattern.permute.xlu0 18
        %836 = vperm.xlu0 %835, %v671
        %v837 = vpop.permute.xlu0 %836
        %v839 = vmul.f32 %v833, %v837
        %v840 = vadd.f32 %v831, %v839
        %841 = vrot.lane.b32.xlu0 %v669, 19
        %v842 = vpop.permute.xlu0 %841
        %844 = vset.pattern.permute.xlu0 19
        %845 = vperm.xlu0 %844, %v671
        %v846 = vpop.permute.xlu0 %845
        %v848 = vmul.f32 %v842, %v846
        %v849 = vadd.f32 %v840, %v848
        %850 = vrot.lane.b32.xlu0 %v669, 20
        %v851 = vpop.permute.xlu0 %850
        %853 = vset.pattern.permute.xlu0 20
        %854 = vperm.xlu0 %853, %v671
        %v855 = vpop.permute.xlu0 %854
        %v857 = vmul.f32 %v851, %v855
        %v858 = vadd.f32 %v849, %v857
        %859 = vrot.lane.b32.xlu0 %v669, 21
        %v860 = vpop.permute.xlu0 %859
        %862 = vset.pattern.permute.xlu0 21
        %863 = vperm.xlu0 %862, %v671
        %v864 = vpop.permute.xlu0 %863
        %v866 = vmul.f32 %v860, %v864
        %v867 = vadd.f32 %v858, %v866
        %868 = vrot.lane.b32.xlu0 %v669, 22
        %v869 = vpop.permute.xlu0 %868
        %871 = vset.pattern.permute.xlu0 22
        %872 = vperm.xlu0 %871, %v671
        %v873 = vpop.permute.xlu0 %872
        %v875 = vmul.f32 %v869, %v873
        %v876 = vadd.f32 %v867, %v875
        %877 = vrot.lane.b32.xlu0 %v669, 23
        %v878 = vpop.permute.xlu0 %877
        %880 = vset.pattern.permute.xlu0 23
        %881 = vperm.xlu0 %880, %v671
        %v882 = vpop.permute.xlu0 %881
        %v884 = vmul.f32 %v878, %v882
        %v885 = vadd.f32 %v876, %v884
        %886 = vrot.lane.b32.xlu0 %v669, 24
        %v887 = vpop.permute.xlu0 %886
        %889 = vset.pattern.permute.xlu0 24
        %890 = vperm.xlu0 %889, %v671
        %v891 = vpop.permute.xlu0 %890
        %v893 = vmul.f32 %v887, %v891
        %v894 = vadd.f32 %v885, %v893
        %895 = vrot.lane.b32.xlu0 %v669, 25
        %v896 = vpop.permute.xlu0 %895
        %898 = vset.pattern.permute.xlu0 25
        %899 = vperm.xlu0 %898, %v671
        %v900 = vpop.permute.xlu0 %899
        %v902 = vmul.f32 %v896, %v900
        %v903 = vadd.f32 %v894, %v902
        %904 = vrot.lane.b32.xlu0 %v669, 26
        %v905 = vpop.permute.xlu0 %904
        %907 = vset.pattern.permute.xlu0 26
        %908 = vperm.xlu0 %907, %v671
        %v909 = vpop.permute.xlu0 %908
        %v911 = vmul.f32 %v905, %v909
        %v912 = vadd.f32 %v903, %v911
        %913 = vrot.lane.b32.xlu0 %v669, 27
        %v914 = vpop.permute.xlu0 %913
        %916 = vset.pattern.permute.xlu0 27
        %917 = vperm.xlu0 %916, %v671
        %v918 = vpop.permute.xlu0 %917
        %v920 = vmul.f32 %v914, %v918
        %v921 = vadd.f32 %v912, %v920
        %923 = vrot.lane.b32.xlu0 0.0, 28
        %v924 = vpop.permute.xlu0 %923
        %926 = vrot.lane.b32.xlu0 %v669, 28
        %v927 = vpop.permute.xlu0 %926
        %v928 = vsel %vm443, %v927, %v924
        %v931 = vsel %vm443, %v924, %v927
        %932 = vset.pattern.permute.xlu0 28
        %933 = vperm.xlu0 %932, %v671
        %v934 = vpop.permute.xlu0 %933
        %v936 = vmul.f32 %v931, %v934
        %v937 = vmul.f32 %v928, %v934
        %v938 = vadd.f32 %v921, %v936
        %939 = vrot.lane.b32.xlu0 0.0, 29
        %v940 = vpop.permute.xlu0 %939
        %942 = vrot.lane.b32.xlu0 %v669, 29
        %v943 = vpop.permute.xlu0 %942
        %v944 = vsel %vm453, %v943, %v940
        %v947 = vsel %vm453, %v940, %v943
        %948 = vset.pattern.permute.xlu0 29
        %949 = vperm.xlu0 %948, %v671
        %v950 = vpop.permute.xlu0 %949
        %v952 = vmul.f32 %v947, %v950
        %v953 = vmul.f32 %v944, %v950
        %v954 = vadd.f32 %v938, %v952
        %v955 = vadd.f32 %v937, %v953
        %956 = vrot.lane.b32.xlu0 0.0, 30
        %v957 = vpop.permute.xlu0 %956
        %959 = vrot.lane.b32.xlu0 %v669, 30
        %v960 = vpop.permute.xlu0 %959
        %v961 = vsel %vm463, %v960, %v957
        %v964 = vsel %vm463, %v957, %v960
        %965 = vset.pattern.permute.xlu0 30
        %966 = vperm.xlu0 %965, %v671
        %v967 = vpop.permute.xlu0 %966
        %v969 = vmul.f32 %v964, %v967
        %v970 = vmul.f32 %v961, %v967
        %v971 = vadd.f32 %v954, %v969
        %v972 = vadd.f32 %v955, %v970
        %973 = vrot.lane.b32.xlu0 0.0, 31
        %v974 = vpop.permute.xlu0 %973
        %976 = vrot.lane.b32.xlu0 %v669, 31
        %v977 = vpop.permute.xlu0 %976
        %v978 = vsel %vm473, %v977, %v974
        %v981 = vsel %vm473, %v974, %v977
        %982 = vset.pattern.permute.xlu0 31
        %983 = vperm.xlu0 %982, %v671
        %v984 = vpop.permute.xlu0 %983
        %v986 = vmul.f32 %v981, %v984
        %v987 = vmul.f32 %v978, %v984
        %v988 = vadd.f32 %v971, %v986
        %v989 = vadd.f32 %v972, %v987
        %990 = vrot.lane.b32.xlu0 0.0, 32
        %v991 = vpop.permute.xlu0 %990
        %993 = vrot.lane.b32.xlu0 %v669, 32
        %v994 = vpop.permute.xlu0 %993
        %v995 = vsel %vm483, %v994, %v991
        %v998 = vsel %vm483, %v991, %v994
        %999 = vset.pattern.permute.xlu0 32
        %1000 = vperm.xlu0 %999, %v671
        %v1001 = vpop.permute.xlu0 %1000
        %v1003 = vmul.f32 %v998, %v1001
        %v1004 = vmul.f32 %v995, %v1001
        %v1005 = vadd.f32 %v988, %v1003
        %v1006 = vadd.f32 %v989, %v1004
        %1007 = vrot.lane.b32.xlu0 0.0, 33
        %v1008 = vpop.permute.xlu0 %1007
        %1010 = vrot.lane.b32.xlu0 %v669, 33
        %v1011 = vpop.permute.xlu0 %1010
        %v1012 = vsel %vm493, %v1011, %v1008
        %v1015 = vsel %vm493, %v1008, %v1011
        %1016 = vset.pattern.permute.xlu0 33
        %1017 = vperm.xlu0 %1016, %v671
        %v1018 = vpop.permute.xlu0 %1017
        %v1020 = vmul.f32 %v1015, %v1018
        %v1021 = vmul.f32 %v1012, %v1018
        %v1022 = vadd.f32 %v1005, %v1020
        %v1023 = vadd.f32 %v1006, %v1021
        %1024 = vrot.lane.b32.xlu0 0.0, 34
        %v1025 = vpop.permute.xlu0 %1024
        %1027 = vrot.lane.b32.xlu0 %v669, 34
        %v1028 = vpop.permute.xlu0 %1027
        %v1029 = vsel %vm503, %v1028, %v1025
        %v1032 = vsel %vm503, %v1025, %v1028
        %1033 = vset.pattern.permute.xlu0 34
        %1034 = vperm.xlu0 %1033, %v671
        %v1035 = vpop.permute.xlu0 %1034
        %v1037 = vmul.f32 %v1032, %v1035
        %v1038 = vmul.f32 %v1029, %v1035
        %v1039 = vadd.f32 %v1022, %v1037
        %v1040 = vadd.f32 %v1023, %v1038
        %1041 = vrot.lane.b32.xlu0 0.0, 35
        %v1042 = vpop.permute.xlu0 %1041
        %1044 = vrot.lane.b32.xlu0 %v669, 35
        %v1045 = vpop.permute.xlu0 %1044
        %v1046 = vsel %vm513, %v1045, %v1042
        %v1049 = vsel %vm513, %v1042, %v1045
        %1050 = vset.pattern.permute.xlu0 35
        %1051 = vperm.xlu0 %1050, %v671
        %v1052 = vpop.permute.xlu0 %1051
        %v1054 = vmul.f32 %v1049, %v1052
        %v1055 = vmul.f32 %v1046, %v1052
        %v1056 = vadd.f32 %v1039, %v1054
        %v1057 = vadd.f32 %v1040, %v1055
        %1058 = vrot.lane.b32.xlu0 0.0, 36
        %v1059 = vpop.permute.xlu0 %1058
        %1061 = vrot.lane.b32.xlu0 %v669, 36
        %v1062 = vpop.permute.xlu0 %1061
        %v1063 = vsel %vm523, %v1062, %v1059
        %v1066 = vsel %vm523, %v1059, %v1062
        %1067 = vset.pattern.permute.xlu0 36
        %1068 = vperm.xlu0 %1067, %v671
        %v1069 = vpop.permute.xlu0 %1068
        %v1071 = vmul.f32 %v1066, %v1069
        %v1072 = vmul.f32 %v1063, %v1069
        %v1073 = vadd.f32 %v1056, %v1071
        %v1074 = vadd.f32 %v1057, %v1072
        %1075 = vrot.lane.b32.xlu0 0.0, 37
        %v1076 = vpop.permute.xlu0 %1075
        %1078 = vrot.lane.b32.xlu0 %v669, 37
        %v1079 = vpop.permute.xlu0 %1078
        %v1080 = vsel %vm533, %v1079, %v1076
        %v1083 = vsel %vm533, %v1076, %v1079
        %1084 = vset.pattern.permute.xlu0 37
        %1085 = vperm.xlu0 %1084, %v671
        %v1086 = vpop.permute.xlu0 %1085
        %v1088 = vmul.f32 %v1083, %v1086
        %v1089 = vmul.f32 %v1080, %v1086
        %v1090 = vadd.f32 %v1073, %v1088
        %v1091 = vadd.f32 %v1074, %v1089
        %1092 = vrot.lane.b32.xlu0 0.0, 38
        %v1093 = vpop.permute.xlu0 %1092
        %1095 = vrot.lane.b32.xlu0 %v669, 38
        %v1096 = vpop.permute.xlu0 %1095
        %v1097 = vsel %vm543, %v1096, %v1093
        %v1100 = vsel %vm543, %v1093, %v1096
        %1101 = vset.pattern.permute.xlu0 38
        %1102 = vperm.xlu0 %1101, %v671
        %v1103 = vpop.permute.xlu0 %1102
        %v1105 = vmul.f32 %v1100, %v1103
        %v1106 = vmul.f32 %v1097, %v1103
        %v1107 = vadd.f32 %v1090, %v1105
        %v1108 = vadd.f32 %v1091, %v1106
        %1109 = vrot.lane.b32.xlu0 0.0, 39
        %v1110 = vpop.permute.xlu0 %1109
        %1112 = vrot.lane.b32.xlu0 %v669, 39
        %v1113 = vpop.permute.xlu0 %1112
        %v1114 = vsel %vm553, %v1113, %v1110
        %v1117 = vsel %vm553, %v1110, %v1113
        %1118 = vset.pattern.permute.xlu0 39
        %1119 = vperm.xlu0 %1118, %v671
        %v1120 = vpop.permute.xlu0 %1119
        %v1122 = vmul.f32 %v1117, %v1120
        %v1123 = vmul.f32 %v1114, %v1120
        %v1124 = vadd.f32 %v1107, %v1122
        %v1125 = vadd.f32 %v1108, %v1123
        %1126 = vrot.lane.b32.xlu0 0.0, 40
        %v1127 = vpop.permute.xlu0 %1126
        %1129 = vrot.lane.b32.xlu0 %v669, 40
        %v1130 = vpop.permute.xlu0 %1129
        %v1131 = vsel %vm563, %v1130, %v1127
        %v1134 = vsel %vm563, %v1127, %v1130
        %1135 = vset.pattern.permute.xlu0 40
        %1136 = vperm.xlu0 %1135, %v671
        %v1137 = vpop.permute.xlu0 %1136
        %v1139 = vmul.f32 %v1134, %v1137
        %v1140 = vmul.f32 %v1131, %v1137
        %v1141 = vadd.f32 %v1124, %v1139
        %v1142 = vadd.f32 %v1125, %v1140
        %1143 = vrot.lane.b32.xlu0 0.0, 41
        %v1144 = vpop.permute.xlu0 %1143
        %1146 = vrot.lane.b32.xlu0 %v669, 41
        %v1147 = vpop.permute.xlu0 %1146
        %v1148 = vsel %vm573, %v1147, %v1144
        %v1151 = vsel %vm573, %v1144, %v1147
        %1152 = vset.pattern.permute.xlu0 41
        %1153 = vperm.xlu0 %1152, %v671
        %v1154 = vpop.permute.xlu0 %1153
        %v1156 = vmul.f32 %v1151, %v1154
        %v1157 = vmul.f32 %v1148, %v1154
        %v1158 = vadd.f32 %v1141, %v1156
        %v1159 = vadd.f32 %v1142, %v1157
        %1160 = vrot.lane.b32.xlu0 0.0, 42
        %v1161 = vpop.permute.xlu0 %1160
        %1163 = vrot.lane.b32.xlu0 %v669, 42
        %v1164 = vpop.permute.xlu0 %1163
        %v1165 = vsel %vm583, %v1164, %v1161
        %v1168 = vsel %vm583, %v1161, %v1164
        %1169 = vset.pattern.permute.xlu0 42
        %1170 = vperm.xlu0 %1169, %v671
        %v1171 = vpop.permute.xlu0 %1170
        %v1173 = vmul.f32 %v1168, %v1171
        %v1174 = vmul.f32 %v1165, %v1171
        %v1175 = vadd.f32 %v1158, %v1173
        %v1176 = vadd.f32 %v1159, %v1174
        %1177 = vrot.lane.b32.xlu0 0.0, 43
        %v1178 = vpop.permute.xlu0 %1177
        %1180 = vrot.lane.b32.xlu0 %v669, 43
        %v1181 = vpop.permute.xlu0 %1180
        %v1182 = vsel %vm593, %v1181, %v1178
        %v1185 = vsel %vm593, %v1178, %v1181
        %1186 = vset.pattern.permute.xlu0 43
        %1187 = vperm.xlu0 %1186, %v671
        %v1188 = vpop.permute.xlu0 %1187
        %v1190 = vmul.f32 %v1185, %v1188
        %v1191 = vmul.f32 %v1182, %v1188
        %v1192 = vadd.f32 %v1175, %v1190
        %v1193 = vadd.f32 %v1176, %v1191
        %1194 = vrot.lane.b32.xlu0 0.0, 44
        %v1195 = vpop.permute.xlu0 %1194
        %1197 = vrot.lane.b32.xlu0 %v669, 44
        %v1198 = vpop.permute.xlu0 %1197
        %v1199 = vsel %vm603, %v1198, %v1195
        %v1202 = vsel %vm603, %v1195, %v1198
        %1203 = vset.pattern.permute.xlu0 44
        %1204 = vperm.xlu0 %1203, %v671
        %v1205 = vpop.permute.xlu0 %1204
        %v1207 = vmul.f32 %v1202, %v1205
        %v1208 = vmul.f32 %v1199, %v1205
        %v1209 = vadd.f32 %v1192, %v1207
        %v1210 = vadd.f32 %v1193, %v1208
        %1211 = vrot.lane.b32.xlu0 0.0, 45
        %v1212 = vpop.permute.xlu0 %1211
        %1214 = vrot.lane.b32.xlu0 %v669, 45
        %v1215 = vpop.permute.xlu0 %1214
        %v1216 = vsel %vm613, %v1215, %v1212
        %v1219 = vsel %vm613, %v1212, %v1215
        %1220 = vset.pattern.permute.xlu0 45
        %1221 = vperm.xlu0 %1220, %v671
        %v1222 = vpop.permute.xlu0 %1221
        %v1224 = vmul.f32 %v1219, %v1222
        %v1225 = vmul.f32 %v1216, %v1222
        %v1226 = vadd.f32 %v1209, %v1224
        %v1227 = vadd.f32 %v1210, %v1225
        %1228 = vrot.lane.b32.xlu0 0.0, 46
        %v1229 = vpop.permute.xlu0 %1228
        %1231 = vrot.lane.b32.xlu0 %v669, 46
        %v1232 = vpop.permute.xlu0 %1231
        %v1233 = vsel %vm623, %v1232, %v1229
        %v1236 = vsel %vm623, %v1229, %v1232
        %1237 = vset.pattern.permute.xlu0 46
        %1238 = vperm.xlu0 %1237, %v671
        %v1239 = vpop.permute.xlu0 %1238
        %v1241 = vmul.f32 %v1236, %v1239
        %v1242 = vmul.f32 %v1233, %v1239
        %v1243 = vadd.f32 %v1226, %v1241
        %v1244 = vadd.f32 %v1227, %v1242
        %1245 = vrot.lane.b32.xlu0 0.0, 47
        %v1246 = vpop.permute.xlu0 %1245
        %1248 = vrot.lane.b32.xlu0 %v669, 47
        %v1249 = vpop.permute.xlu0 %1248
        %v1250 = vsel %vm633, %v1249, %v1246
        %v1253 = vsel %vm633, %v1246, %v1249
        %1254 = vset.pattern.permute.xlu0 47
        %1255 = vperm.xlu0 %1254, %v671
        %v1256 = vpop.permute.xlu0 %1255
        %v1258 = vmul.f32 %v1253, %v1256
        %v1259 = vmul.f32 %v1250, %v1256
        %v1260 = vadd.f32 %v1243, %v1258
        %v1261 = vadd.f32 %v1244, %v1259
        %1262 = vrot.lane.b32.xlu0 0.0, 48
        %v1263 = vpop.permute.xlu0 %1262
        %1265 = vrot.lane.b32.xlu0 %v669, 48
        %v1266 = vpop.permute.xlu0 %1265
        %v1267 = vsel %vm643, %v1266, %v1263
        %v1270 = vsel %vm643, %v1263, %v1266
        %1271 = vset.pattern.permute.xlu0 48
        %1272 = vperm.xlu0 %1271, %v671
        %v1273 = vpop.permute.xlu0 %1272
        %v1275 = vmul.f32 %v1270, %v1273
        %v1276 = vmul.f32 %v1267, %v1273
        %v1277 = vadd.f32 %v1260, %v1275
        %v1278 = vadd.f32 %v1261, %v1276
        %1279 = vrot.lane.b32.xlu0 0.0, 49
        %v1280 = vpop.permute.xlu0 %1279
        %1282 = vrot.lane.b32.xlu0 %v669, 49
        %v1283 = vpop.permute.xlu0 %1282
        %v1284 = vsel %vm653, %v1283, %v1280
        %v1287 = vsel %vm653, %v1280, %v1283
        %1288 = vset.pattern.permute.xlu0 49
        %1289 = vperm.xlu0 %1288, %v671
        %v1290 = vpop.permute.xlu0 %1289
        %v1292 = vmul.f32 %v1287, %v1290
        %v1293 = vmul.f32 %v1284, %v1290
        %v1294 = vadd.f32 %v1277, %v1292
        %v1295 = vadd.f32 %v1278, %v1293
        %1296 = vrot.lane.b32.xlu0 0.0, 50
        %v1297 = vpop.permute.xlu0 %1296
        %1299 = vrot.lane.b32.xlu0 %v669, 50
        %v1300 = vpop.permute.xlu0 %1299
        %v1301 = vsel %vm663, %v1300, %v1297
        %v1304 = vsel %vm663, %v1297, %v1300
        %1305 = vset.pattern.permute.xlu0 50
        %1306 = vperm.xlu0 %1305, %v671
        %v1307 = vpop.permute.xlu0 %1306
        %v1309 = vmul.f32 %v1304, %v1307
        %v1310 = vmul.f32 %v1301, %v1307
        %v1311 = vadd.f32 %v1294, %v1309
        %v1312 = vadd.f32 %v1295, %v1310
        %v1313 = vld [vmem:[%s1] sm:$0xff]
        %v1314 = vld [vmem:[%s1 + $0x8] sm:$0xff]
        %v1315 = vld [vmem:[%s1 + $0x10] sm:$0xff]
        %v1316 = vld [vmem:[%s1 + $0x18] sm:$0xff]
        %v1317 = vld [vmem:[%s1 + $0x20] sm:$0xff]
        %v1318 = vld [vmem:[%s1 + $0x28] sm:$0xff]
        %v1319 = vld [vmem:[%s1 + $0x30] sm:$0xff]
        %v1320 = vld [vmem:[%s1 + $0x38] sm:$0xff]
        %v1321 = vld [vmem:[%s1 + $0x40] sm:$0xff]
        %v1322 = vld [vmem:[%s1 + $0x48] sm:$0xff]
        %v1323 = vld [vmem:[%s1 + $0x50] sm:$0xff]
        %v1324 = vld [vmem:[%s1 + $0x58] sm:$0xff]
        %v1325 = vld [vmem:[%s1 + $0x60] sm:$0xff]
        %v1326 = vld [vmem:[%s1 + $0x68] sm:$0xff]
        %v1327 = vld [vmem:[%s1 + $0x70] sm:$0xff]
        %v1328 = vld [vmem:[%s1 + $0x78] sm:$0xff]
        %v1329 = vld [vmem:[%s1 + $0x80] sm:$0xff]
        %v1330 = vld [vmem:[%s1 + $0x88] sm:$0xff]
        %v1331 = vld [vmem:[%s1 + $0x90] sm:$0xff]
        %v1332 = vld [vmem:[%s1 + $0x98] sm:$0xff]
        %v1333 = vld [vmem:[%s1 + $0xa0] sm:$0xff]
        %v1334 = vld [vmem:[%s1 + $0xa8] sm:$0xff]
        %v1335 = vld [vmem:[%s1 + $0xb0] sm:$0xff]
        %v1336 = vld [vmem:[%s1 + $0xb8] sm:$0xff]
        %v1337 = vld [vmem:[%s1 + $0xc0] sm:$0xff]
        %v1338 = vld [vmem:[%s1 + $0xc8] sm:$0xff]
        %v1339 = vld [vmem:[%s1 + $0xd0] sm:$0xff]
        %v1340 = vld [vmem:[%s1 + $0xd8] sm:$0xff]
        %v1341 = vld [vmem:[%s1 + $0xe0] sm:$0xff]
        %v1342 = vld [vmem:[%s1 + $0xe8] sm:$0xff]
        %v1343 = vld [vmem:[%s1 + $0xf0] sm:$0xff]
        %v1344 = vld [vmem:[%s1 + $0xf8] sm:$0xff]
        %1345 = vmatprep.subr.mxu0 0.0
        %1346 = vmatpush1.msra.mxu0 %v1328
        %1347 = vmatprep.subr.mxu0 0.0
        %1348 = vmatpush1.msra.mxu0 %v1327
        %1349 = vmatprep.subr.mxu0 0.0
        %1350 = vmatpush1.msra.mxu0 %v1326
        %1351 = vmatprep.subr.mxu0 0.0
        %1352 = vmatpush1.msra.mxu0 %v1325
        %1353 = vmatprep.subr.mxu0 0.0
        %1354 = vmatpush1.msra.mxu0 %v1324
        %1355 = vmatprep.subr.mxu0 0.0
        %1356 = vmatpush1.msra.mxu0 %v1323
        %1357 = vmatprep.subr.mxu0 0.0
        %1358 = vmatpush1.msra.mxu0 %v1322
        %1359 = vmatprep.subr.mxu0 0.0
        %1360 = vmatpush1.msra.mxu0 %v1321
        %1361 = vmatprep.subr.mxu0 0.0
        %1362 = vmatpush1.msra.mxu0 %v1320
        %1363 = vmatprep.subr.mxu0 0.0
        %1364 = vmatpush1.msra.mxu0 %v1319
        %1365 = vmatprep.subr.mxu0 0.0
        %1366 = vmatpush1.msra.mxu0 %v1318
        %1367 = vmatprep.subr.mxu0 0.0
        %1368 = vmatpush1.msra.mxu0 %v1317
        %1369 = vmatprep.subr.mxu0 0.0
        %1370 = vmatpush1.msra.mxu0 %v1316
        %1371 = vmatprep.subr.mxu0 0.0
        %1372 = vmatpush1.msra.mxu0 %v1315
        %1373 = vmatprep.subr.mxu0 0.0
        %1374 = vmatpush1.msra.mxu0 %v1314
        %1375 = vmatprep.subr.mxu0 0.0
        %1376 = vmatpush1.msra.mxu0 %v1313
        %1377 = vmatprep.subr.mxu0 0.0
        %1378 = vmatpush2.msra.mxu0 %v1344
        %1379 = vmatprep.subr.mxu0 0.0
        %1380 = vmatpush2.msra.mxu0 %v1343
        %1381 = vmatprep.subr.mxu0 0.0
        %1382 = vmatpush2.msra.mxu0 %v1342
        %1383 = vmatprep.subr.mxu0 0.0
        %1384 = vmatpush2.msra.mxu0 %v1341
        %1385 = vmatprep.subr.mxu0 0.0
        %1386 = vmatpush2.msra.mxu0 %v1340
        %1387 = vmatprep.subr.mxu0 0.0
        %1388 = vmatpush2.msra.mxu0 %v1339
        %1389 = vmatprep.subr.mxu0 0.0
        %1390 = vmatpush2.msra.mxu0 %v1338
        %1391 = vmatprep.subr.mxu0 0.0
        %1392 = vmatpush2.msra.mxu0 %v1337
        %1393 = vmatprep.subr.mxu0 0.0
        %1394 = vmatpush2.msra.mxu0 %v1336
        %1395 = vmatprep.subr.mxu0 0.0
        %1396 = vmatpush2.msra.mxu0 %v1335
        %1397 = vmatprep.subr.mxu0 0.0
        %1398 = vmatpush2.msra.mxu0 %v1334
        %1399 = vmatprep.subr.mxu0 0.0
        %1400 = vmatpush2.msra.mxu0 %v1333
        %1401 = vmatprep.subr.mxu0 0.0
        %1402 = vmatpush2.msra.mxu0 %v1332
        %1403 = vmatprep.subr.mxu0 0.0
        %1404 = vmatpush2.msra.mxu0 %v1331
        %1405 = vmatprep.subr.mxu0 0.0
        %1406 = vmatpush2.msra.mxu0 %v1330
        %1407 = vmatprep.subr.mxu0 0.0
        %1408 = vmatpush2.msra.mxu0 %v1329
        %1409 = vmatprep.mubr.f32.mxu0 %v1312
        %1410 = vmatmul.mubr.f32.gmra.mxu0 %v1311
        %v1411 = vpop.f32.mrf.mxu0
        %v1412 = vadd.f32 0.0, %v1411
        %v1413 = vpop.f32.mrf.mxu0
        %1414 = vdwg.mxu0
        %1415 = vst.msk [vmem:[%s184] sm:$0xff] %vm188, %v1412
        %s1416 = sand.u32 %s71, 1
        %s1417 = scalar_lea.sflag [#allocation4], %s1416
        %s1418 = sand.u32 %s71, 1
        %s1419 = smul.addr %s1418, 8
        %s1420 = scalar_lea.vmem [#allocation3], %s1419
        // Predicated region
        $region67: #{tpu_custom_call.1} parent=61 // pred_check
          %p1421 = pneg %p81
        $region68: #{tpu_custom_call.1} parent=61 // pred_check_branch
          %1423 = sbr.rel (%p1421) target = $region70
        $region69: #{tpu_custom_call.1} parent=61 // pred_region
          %s1425 = ssub.s32 128, 128
          %1426 = vsyncadd %s1417, %s1425
          %s1427 = smul.addr %s16, 128
          %s1428 = scalar_lea.hbm %s2, %s1427
          %s1430 = sshll.u32 %s1420, 4
          %s1431 = int_to_ptr.vmem [resolvable:$true] %s1430
          %1433 = dma.vmem_to_hbm [thread:$0]  %s1431, 128, %s1428, %s1417
        $region70: #{tpu_custom_call.1} parent=61 // pred_fallthru
          _
      $region62: #{tpu_custom_call.1} parent=5 // pred_fallthru
        _
      %p1434 = scmp.le.s32.totalorder 2, %s11
      // Predicated region
      $region71: #{tpu_custom_call.1} parent=5 // pred_check
        %p1435 = pneg %p1434
      $region72: #{tpu_custom_call.1} parent=5 // pred_check_branch
        %1437 = sbr.rel (%p1435) target = $region74
      $region73: #{tpu_custom_call.1} parent=5 // pred_region
        %s1438 = ssub.s32 %s11, 2
        // Predicated region
        $region75: #{tpu_custom_call.1} parent=73 // pred_check
          %p1439 = pneg %p87
        $region76: #{tpu_custom_call.1} parent=73 // pred_check_branch
          %1441 = sbr.rel (%p1439) target = $region78
        $region77: #{tpu_custom_call.1} parent=73 // pred_region
          %s1442 = sand.u32 %s72, 1
          %s1443 = scalar_lea.sflag [#allocation4], %s1442
          %s1444 = sand.u32 %s72, 1
          %s1445 = smul.addr %s1444, 8
          %s1446 = scalar_lea.vmem [#allocation3], %s1445
          %1447 = dma.done %s1443, 128
        $region78: #{tpu_custom_call.1} parent=73 // pred_fallthru
          _
      $region74: #{tpu_custom_call.1} parent=5 // pred_fallthru
        _
    $region6: #{tpu_custom_call.1} parent=1 // loop_footer
      %s15 = sadd.s32 1, %s11
    $region7: #{tpu_custom_call.1} parent=1 // loop_footer_branch
      %10 = sbr.rel target = $region3
    $region8: #{tpu_custom_call.1} parent=1 // loop_exit
      _
    %1448 = vsyncpa [#allocation4], 1
    %s1449 = scalar_lea.sflag [#allocation4], 1
    %1450 = vsyncpa %s1449, 1

</llo_original>
